<compile_context>
chip_gen: v7x
topology: tpu7x:2x2x1
jax: 0.10.0
libtpu: 0.0.40
codegen_flags: <defaults>
</compile_context>

<pallas_src>
import jax
import jax.numpy as jnp
from jax.experimental import pallas as pl
from jax.experimental.pallas import tpu as pltpu


# ------------------------------ Pallas kernel ------------------------------ #

def _make_fused_kernel(num_layers, T, B, H):
    """Build the fused kernel for a fixed (num_layers, T, B, H)."""

    def kernel(*args):
        nlw = 3 * num_layers
        x_ref = args[0]                       # (T*B, obs)   VMEM
        layer_refs = args[1:1 + nlw]          # per layer: W_ih, W_hh, bias
        wm_ref = args[1 + nlw]                # (H, A)
        bm_ref = args[2 + nlw]                # (1, A)
        act_ref = args[3 + nlw]               # (B, A)  output
        seq_scr = args[4 + nlw]               # (T*B, H)   layer-to-layer h seq
        gx_scr = args[5 + nlw]                # (T*B, 4H)  hoisted input gates

        latent = jnp.zeros((B, H), jnp.float32)

        for l in range(num_layers):
            wih_ref = layer_refs[3 * l]
            whh_ref = layer_refs[3 * l + 1]
            b_ref = layer_refs[3 * l + 2]

            # Layer input: raw x for layer 0, previous layer's h sequence after.
            inp = x_ref[...] if l == 0 else seq_scr[...]

            # Hoisted input projection (no recurrent dependency): one MXU matmul
            # for the whole sequence, bias fused in.
            gx_scr[...] = (jnp.dot(inp, wih_ref[...],
                                   preferred_element_type=jnp.float32)
                           + b_ref[...])

            whh = whh_ref[...]                      # (H, 4H), kept in vregs
            write_seq = l < num_layers - 1          # last layer: only need h_T

            def step(t, carry, _write_seq=write_seq):
                h, c = carry
                row = pl.multiple_of(t * B, B)
                gates = (gx_scr[pl.ds(row, B), :]
                         + jnp.dot(h, whh, preferred_element_type=jnp.float32))
                # 2 full-width EUP passes instead of 4 quarter-vreg ones.
                sig = jax.nn.sigmoid(gates)
                tnh = jnp.tanh(gates)
                i_g = sig[:, 0:H]
                f_g = sig[:, H:2 * H]
                g_g = tnh[:, 2 * H:3 * H]
                o_g = sig[:, 3 * H:4 * H]
                c_new = f_g * c + i_g * g_g
                h_new = o_g * jnp.tanh(c_new)
                if _write_seq:
                    seq_scr[pl.ds(row, B), :] = h_new
                return (h_new, c_new)

            h0 = jnp.zeros((B, H), jnp.float32)
            c0 = jnp.zeros((B, H), jnp.float32)
            # Serial recurrence: unrolled in-kernel loop, h/c stay in registers.
            latent, _ = jax.lax.fori_loop(0, T, step, (h0, c0), unroll=True)

        # Actor head fused: mu = latent @ W_means + b; bounded -> tanh.
        # TODO(synk): log_stds head (clamp/exp) is computed in PyTorch but unused
        # when deterministic=True and return_log_prob=False; omitted here.
        mu = (jnp.dot(latent, wm_ref[...], preferred_element_type=jnp.float32)
              + bm_ref[...])
        act_ref[...] = jnp.tanh(mu).astype(act_ref.dtype)

    return kernel


# ------------------------------ host wrapper ------------------------------- #

def lstm_actor_forward(params, x):
    # Fold Welford normalization (a per-feature affine) into layer-0 weights:
    #   ((x - mean)/denom) @ W + b  ==  x @ (W/denom[:,None]) + (b - (mean/denom) @ W)
    # With fresh stats (n=1, mean=0, diff=1) this is exactly identity.
    # TODO(synk): no epsilon in denom (matches the PyTorch module).
    denom = jnp.sqrt(params["welford_diff"] / params["welford_n"])      # (obs,)
    w0, whh0, b0 = params["lstm"][0]
    w0_f = w0 / denom[:, None]
    b0_f = b0 - (params["welford_mean"] / denom)[None, :] @ w0
    lstm_params = [(w0_f, whh0, b0_f)] + list(params["lstm"][1:])

    if x.ndim == 2:                 # (B, obs) -> (1, B, obs) like unsqueeze(0)
        x = x[None]
    T, B, obs = x.shape
    H = whh0.shape[0]
    A = params["w_means"].shape[1]
    num_layers = len(lstm_params)

    x2d = x.reshape(T * B, obs)     # free reshape outside the kernel

    inputs = [x2d]
    for wih, whh, b in lstm_params:
        inputs += [wih, whh, b]
    inputs += [params["w_means"], params["b_means"]]

    vmem_spec = pl.BlockSpec(memory_space=pltpu.MemorySpace.VMEM)
    in_specs = [vmem_spec] * len(inputs)

    # Advisory cost hint so XLA schedules the tiny custom call sensibly.
    in_dims = [obs] + [H] * (num_layers - 1)
    flops = sum(2 * T * B * (d + H) * 4 * H + 12 * T * B * H for d in in_dims)
    flops += 2 * B * H * A + B * A
    transc = num_layers * T * (2 * B * 4 * H + B * H) + B * A
    bytes_accessed = 4 * (int(x2d.size)
                          + sum(int(a.size) for tup in lstm_params for a in tup)
                          + int(params["w_means"].size)
                          + int(params["b_means"].size)
                          + B * A)

    kernel = _make_fused_kernel(num_layers, T, B, H)

    return pl.pallas_call(
        kernel,
        out_shape=jax.ShapeDtypeStruct((B, A), jnp.float32),
        in_specs=in_specs,
        out_specs=vmem_spec,
        scratch_shapes=[
            pltpu.VMEM((T * B, H), jnp.float32),       # layer-to-layer h sequence
            pltpu.VMEM((T * B, 4 * H), jnp.float32),   # hoisted x @ W_ih gates
        ],
        cost_estimate=pl.CostEstimate(flops=int(flops),
                                      transcendentals=int(transc),
                                      bytes_accessed=int(bytes_accessed)),
    )(*inputs)


# --------------------------- deterministic params --------------------------- #

def init_params(key, obs_dim, action_dim, layers):
    H = layers[0]
    params = {"lstm": []}
    k = key
    bound = 1.0 / float(jnp.sqrt(jnp.float32(H)))
    for l in range(len(layers)):
        in_dim = obs_dim if l == 0 else H
        k, k1, k2, k3, k4 = jax.random.split(k, 5)
        w_ih = jax.random.uniform(k1, (4 * H, in_dim), jnp.float32, -bound, bound)
        w_hh = jax.random.uniform(k2, (4 * H, H), jnp.float32, -bound, bound)
        b_ih = jax.random.uniform(k3, (4 * H,), jnp.float32, -bound, bound)
        b_hh = jax.random.uniform(k4, (4 * H,), jnp.float32, -bound, bound)
        # store transposed + fused bias, shaped for the kernel
        params["lstm"].append((w_ih.T, w_hh.T, (b_ih + b_hh)[None, :]))
    k, km1, km2 = jax.random.split(k, 3)
    w_means = jax.random.uniform(km1, (action_dim, H), jnp.float32, -bound, bound)
    b_means = jax.random.uniform(km2, (action_dim,), jnp.float32, -bound, bound)
    params["w_means"] = w_means.T
    params["b_means"] = b_means[None, :]
    params["welford_mean"] = jnp.zeros((obs_dim,), jnp.float32)
    params["welford_diff"] = jnp.ones((obs_dim,), jnp.float32)
    params["welford_n"] = jnp.float32(1.0)
    return params


# ------------------------------ pure-JAX ref -------------------------------- #

def reference_forward(params, x):
    x = (x - params["welford_mean"]) / jnp.sqrt(
        params["welford_diff"] / params["welford_n"])
    if x.ndim == 2:
        x = x[None]
    h_seq = x
    for (w_ih_t, w_hh_t, b) in params["lstm"]:
        H = w_hh_t.shape[0]
        B = h_seq.shape[1]

        def step(carry, x_t):
            h, c = carry
            gates = x_t @ w_ih_t + h @ w_hh_t + b
            i = jax.nn.sigmoid(gates[:, :H])
            f = jax.nn.sigmoid(gates[:, H:2 * H])
            g = jnp.tanh(gates[:, 2 * H:3 * H])
            o = jax.nn.sigmoid(gates[:, 3 * H:])
            c = f * c + i * g
            h = o * jnp.tanh(c)
            return (h, c), h

        init = (jnp.zeros((B, H), jnp.float32), jnp.zeros((B, H), jnp.float32))
        _, h_seq = jax.lax.scan(step, init, h_seq)
    latent = h_seq[-1]
    mu = latent @ params["w_means"] + params["b_means"]
    return jnp.tanh(mu)


# ---------------------------------- main ------------------------------------ #

if __name__ == "__main__":
    obs_dim, action_dim = 16, 8
    layers = [32, 32]            # two-layer LSTM, hidden=32
    T, B = 8, 4                  # seq_len=8, batch=4 (time-major)

    key = jax.random.PRNGKey(0)
    kp, kx = jax.random.split(key)
    params = init_params(kp, obs_dim, action_dim, layers)
    x = jax.random.normal(kx, (T, B, obs_dim), jnp.float32)

    action = lstm_actor_forward(params, x)
    action = jax.block_until_ready(action)

    ref = reference_forward(params, x)
    assert action.shape == (B, action_dim), action.shape
    assert jnp.allclose(action, ref, atol=1e-5, rtol=1e-5), \
        float(jnp.max(jnp.abs(action - ref)))
    print("KERNEL_OK")
</pallas_src>

<mosaic_0001>
module attributes {stable_mosaic.version = 11 : i64} {
  func.func @kernel(%arg0: memref<32x16xf32, #tpu.memory_space<vmem>>, %arg1: memref<16x128xf32, #tpu.memory_space<vmem>>, %arg2: memref<32x128xf32, #tpu.memory_space<vmem>>, %arg3: memref<1x128xf32, #tpu.memory_space<vmem>>, %arg4: memref<32x128xf32, #tpu.memory_space<vmem>>, %arg5: memref<32x128xf32, #tpu.memory_space<vmem>>, %arg6: memref<1x128xf32, #tpu.memory_space<vmem>>, %arg7: memref<32x8xf32, #tpu.memory_space<vmem>>, %arg8: memref<1x8xf32, #tpu.memory_space<vmem>>, %arg9: memref<4x8xf32, #tpu.memory_space<vmem>>, %arg10: memref<32x32xf32, #tpu.memory_space<vmem>>, %arg11: memref<32x128xf32, #tpu.memory_space<vmem>>) attributes {dimension_semantics = [], scalar_prefetch = 0 : i64, scratch_operands = 2 : i64, tpu.core_type = #tpu.core_type<tc>} {
    %c0 = arith.constant 0 : index
    %c0_0 = arith.constant 0 : index
    %0 = vector.load %arg0[%c0, %c0_0] : memref<32x16xf32, #tpu.memory_space<vmem>>, vector<32x16xf32>
    %c0_1 = arith.constant 0 : index
    %c0_2 = arith.constant 0 : index
    %1 = vector.load %arg1[%c0_1, %c0_2] : memref<16x128xf32, #tpu.memory_space<vmem>>, vector<16x128xf32>
    %cst = arith.constant dense<0.000000e+00> : vector<32x128xf32>
    %2 = tpu.matmul %0, %1, %cst {dimension_numbers = #tpu.dot_dimension_numbers<[1], [0], [0], [1], [0, 0, 1, 1], [], []>} : vector<32x16xf32>, vector<16x128xf32>, vector<32x128xf32> -> vector<32x128xf32>
    %c0_3 = arith.constant 0 : index
    %c0_4 = arith.constant 0 : index
    %3 = vector.load %arg3[%c0_3, %c0_4] : memref<1x128xf32, #tpu.memory_space<vmem>>, vector<1x128xf32>
    %4 = vector.broadcast %3 : vector<1x128xf32> to vector<32x128xf32>
    %5 = arith.addf %2, %4 : vector<32x128xf32>
    %c0_5 = arith.constant 0 : index
    %c0_6 = arith.constant 0 : index
    %6 = vector.load %arg11[%c0_5, %c0_6] : memref<32x128xf32, #tpu.memory_space<vmem>>, vector<32x128xf32>
    tpu.vector_store %arg11[%c0_5, %c0_6], %5 {strides = array<i32>} : memref<32x128xf32, #tpu.memory_space<vmem>>, vector<32x128xf32>,
    %c0_7 = arith.constant 0 : index
    %c0_8 = arith.constant 0 : index
    %7 = vector.load %arg2[%c0_7, %c0_8] : memref<32x128xf32, #tpu.memory_space<vmem>>, vector<32x128xf32>
    %cst_9 = arith.constant 0.000000e+00 : f32
    %8 = vector.broadcast %cst_9 : f32 to vector<4x32xf32>
    %cst_10 = arith.constant 0.000000e+00 : f32
    %9 = vector.broadcast %cst_10 : f32 to vector<4x32xf32>
    %c0_i32 = arith.constant 0 : i32
    %c4_i32 = arith.constant 4 : i32
    %10 = arith.muli %c0_i32, %c4_i32 : i32
    %11 = tpu.assume_multiple %10, 4 : i32
    %12 = arith.index_cast %11 : i32 to index
    %c0_11 = arith.constant 0 : index
    %13 = vector.load %arg11[%12, %c0_11] : memref<32x128xf32, #tpu.memory_space<vmem>>, vector<4x128xf32>
    %cst_12 = arith.constant dense<0.000000e+00> : vector<4x128xf32>
    %14 = tpu.matmul %8, %7, %cst_12 {dimension_numbers = #tpu.dot_dimension_numbers<[1], [0], [0], [1], [0, 0, 1, 1], [], []>} : vector<4x32xf32>, vector<32x128xf32>, vector<4x128xf32> -> vector<4x128xf32>
    %15 = arith.addf %13, %14 : vector<4x128xf32>
    %16 = arith.negf %15 : vector<4x128xf32>
    %17 = math.exp %16 : vector<4x128xf32>
    %cst_13 = arith.constant 1.000000e+00 : f32
    %18 = vector.broadcast %cst_13 : f32 to vector<4x128xf32>
    %19 = arith.addf %18, %17 : vector<4x128xf32>
    %20 = arith.divf %18, %19 : vector<4x128xf32>
    %21 = math.tanh %15 : vector<4x128xf32>
    %22 = vector.extract_strided_slice %20 {offsets = [0, 0], sizes = [4, 32], strides = [1, 1]} : vector<4x128xf32> to vector<4x32xf32>
    %23 = vector.extract_strided_slice %20 {offsets = [0, 32], sizes = [4, 32], strides = [1, 1]} : vector<4x128xf32> to vector<4x32xf32>
    %24 = vector.extract_strided_slice %21 {offsets = [0, 64], sizes = [4, 32], strides = [1, 1]} : vector<4x128xf32> to vector<4x32xf32>
    %25 = vector.extract_strided_slice %20 {offsets = [0, 96], sizes = [4, 32], strides = [1, 1]} : vector<4x128xf32> to vector<4x32xf32>
    %26 = arith.mulf %23, %9 : vector<4x32xf32>
    %27 = arith.mulf %22, %24 : vector<4x32xf32>
    %28 = arith.addf %26, %27 : vector<4x32xf32>
    %29 = math.tanh %28 : vector<4x32xf32>
    %30 = arith.mulf %25, %29 : vector<4x32xf32>
    %31 = arith.index_cast %11 : i32 to index
    %c0_14 = arith.constant 0 : index
    %32 = vector.load %arg10[%31, %c0_14] : memref<32x32xf32, #tpu.memory_space<vmem>>, vector<4x32xf32>
    tpu.vector_store %arg10[%31, %c0_14], %30 {strides = array<i32>} : memref<32x32xf32, #tpu.memory_space<vmem>>, vector<4x32xf32>,
    %c1_i32 = arith.constant 1 : i32
    %c4_i32_15 = arith.constant 4 : i32
    %33 = arith.muli %c1_i32, %c4_i32_15 : i32
    %34 = tpu.assume_multiple %33, 4 : i32
    %35 = arith.index_cast %34 : i32 to index
    %c0_16 = arith.constant 0 : index
    %36 = vector.load %arg11[%35, %c0_16] : memref<32x128xf32, #tpu.memory_space<vmem>>, vector<4x128xf32>
    %cst_17 = arith.constant dense<0.000000e+00> : vector<4x128xf32>
    %37 = tpu.matmul %30, %7, %cst_17 {dimension_numbers = #tpu.dot_dimension_numbers<[1], [0], [0], [1], [0, 0, 1, 1], [], []>} : vector<4x32xf32>, vector<32x128xf32>, vector<4x128xf32> -> vector<4x128xf32>
    %38 = arith.addf %36, %37 : vector<4x128xf32>
    %39 = arith.negf %38 : vector<4x128xf32>
    %40 = math.exp %39 : vector<4x128xf32>
    %cst_18 = arith.constant 1.000000e+00 : f32
    %41 = vector.broadcast %cst_18 : f32 to vector<4x128xf32>
    %42 = arith.addf %41, %40 : vector<4x128xf32>
    %43 = arith.divf %41, %42 : vector<4x128xf32>
    %44 = math.tanh %38 : vector<4x128xf32>
    %45 = vector.extract_strided_slice %43 {offsets = [0, 0], sizes = [4, 32], strides = [1, 1]} : vector<4x128xf32> to vector<4x32xf32>
    %46 = vector.extract_strided_slice %43 {offsets = [0, 32], sizes = [4, 32], strides = [1, 1]} : vector<4x128xf32> to vector<4x32xf32>
    %47 = vector.extract_strided_slice %44 {offsets = [0, 64], sizes = [4, 32], strides = [1, 1]} : vector<4x128xf32> to vector<4x32xf32>
    %48 = vector.extract_strided_slice %43 {offsets = [0, 96], sizes = [4, 32], strides = [1, 1]} : vector<4x128xf32> to vector<4x32xf32>
    %49 = arith.mulf %46, %28 : vector<4x32xf32>
    %50 = arith.mulf %45, %47 : vector<4x32xf32>
    %51 = arith.addf %49, %50 : vector<4x32xf32>
    %52 = math.tanh %51 : vector<4x32xf32>
    %53 = arith.mulf %48, %52 : vector<4x32xf32>
    %54 = arith.index_cast %34 : i32 to index
    %c0_19 = arith.constant 0 : index
    %55 = vector.load %arg10[%54, %c0_19] : memref<32x32xf32, #tpu.memory_space<vmem>>, vector<4x32xf32>
    tpu.vector_store %arg10[%54, %c0_19], %53 {strides = array<i32>} : memref<32x32xf32, #tpu.memory_space<vmem>>, vector<4x32xf32>,
    %c2_i32 = arith.constant 2 : i32
    %c4_i32_20 = arith.constant 4 : i32
    %56 = arith.muli %c2_i32, %c4_i32_20 : i32
    %57 = tpu.assume_multiple %56, 4 : i32
    %58 = arith.index_cast %57 : i32 to index
    %c0_21 = arith.constant 0 : index
    %59 = vector.load %arg11[%58, %c0_21] : memref<32x128xf32, #tpu.memory_space<vmem>>, vector<4x128xf32>
    %cst_22 = arith.constant dense<0.000000e+00> : vector<4x128xf32>
    %60 = tpu.matmul %53, %7, %cst_22 {dimension_numbers = #tpu.dot_dimension_numbers<[1], [0], [0], [1], [0, 0, 1, 1], [], []>} : vector<4x32xf32>, vector<32x128xf32>, vector<4x128xf32> -> vector<4x128xf32>
    %61 = arith.addf %59, %60 : vector<4x128xf32>
    %62 = arith.negf %61 : vector<4x128xf32>
    %63 = math.exp %62 : vector<4x128xf32>
    %cst_23 = arith.constant 1.000000e+00 : f32
    %64 = vector.broadcast %cst_23 : f32 to vector<4x128xf32>
    %65 = arith.addf %64, %63 : vector<4x128xf32>
    %66 = arith.divf %64, %65 : vector<4x128xf32>
    %67 = math.tanh %61 : vector<4x128xf32>
    %68 = vector.extract_strided_slice %66 {offsets = [0, 0], sizes = [4, 32], strides = [1, 1]} : vector<4x128xf32> to vector<4x32xf32>
    %69 = vector.extract_strided_slice %66 {offsets = [0, 32], sizes = [4, 32], strides = [1, 1]} : vector<4x128xf32> to vector<4x32xf32>
    %70 = vector.extract_strided_slice %67 {offsets = [0, 64], sizes = [4, 32], strides = [1, 1]} : vector<4x128xf32> to vector<4x32xf32>
    %71 = vector.extract_strided_slice %66 {offsets = [0, 96], sizes = [4, 32], strides = [1, 1]} : vector<4x128xf32> to vector<4x32xf32>
    %72 = arith.mulf %69, %51 : vector<4x32xf32>
    %73 = arith.mulf %68, %70 : vector<4x32xf32>
    %74 = arith.addf %72, %73 : vector<4x32xf32>
    %75 = math.tanh %74 : vector<4x32xf32>
    %76 = arith.mulf %71, %75 : vector<4x32xf32>
    %77 = arith.index_cast %57 : i32 to index
    %c0_24 = arith.constant 0 : index
    %78 = vector.load %arg10[%77, %c0_24] : memref<32x32xf32, #tpu.memory_space<vmem>>, vector<4x32xf32>
    tpu.vector_store %arg10[%77, %c0_24], %76 {strides = array<i32>} : memref<32x32xf32, #tpu.memory_space<vmem>>, vector<4x32xf32>,
    %c3_i32 = arith.constant 3 : i32
    %c4_i32_25 = arith.constant 4 : i32
    %79 = arith.muli %c3_i32, %c4_i32_25 : i32
    %80 = tpu.assume_multiple %79, 4 : i32
    %81 = arith.index_cast %80 : i32 to index
    %c0_26 = arith.constant 0 : index
    %82 = vector.load %arg11[%81, %c0_26] : memref<32x128xf32, #tpu.memory_space<vmem>>, vector<4x128xf32>
    %cst_27 = arith.constant dense<0.000000e+00> : vector<4x128xf32>
    %83 = tpu.matmul %76, %7, %cst_27 {dimension_numbers = #tpu.dot_dimension_numbers<[1], [0], [0], [1], [0, 0, 1, 1], [], []>} : vector<4x32xf32>, vector<32x128xf32>, vector<4x128xf32> -> vector<4x128xf32>
    %84 = arith.addf %82, %83 : vector<4x128xf32>
    %85 = arith.negf %84 : vector<4x128xf32>
    %86 = math.exp %85 : vector<4x128xf32>
    %cst_28 = arith.constant 1.000000e+00 : f32
    %87 = vector.broadcast %cst_28 : f32 to vector<4x128xf32>
    %88 = arith.addf %87, %86 : vector<4x128xf32>
    %89 = arith.divf %87, %88 : vector<4x128xf32>
    %90 = math.tanh %84 : vector<4x128xf32>
    %91 = vector.extract_strided_slice %89 {offsets = [0, 0], sizes = [4, 32], strides = [1, 1]} : vector<4x128xf32> to vector<4x32xf32>
    %92 = vector.extract_strided_slice %89 {offsets = [0, 32], sizes = [4, 32], strides = [1, 1]} : vector<4x128xf32> to vector<4x32xf32>
    %93 = vector.extract_strided_slice %90 {offsets = [0, 64], sizes = [4, 32], strides = [1, 1]} : vector<4x128xf32> to vector<4x32xf32>
    %94 = vector.extract_strided_slice %89 {offsets = [0, 96], sizes = [4, 32], strides = [1, 1]} : vector<4x128xf32> to vector<4x32xf32>
    %95 = arith.mulf %92, %74 : vector<4x32xf32>
    %96 = arith.mulf %91, %93 : vector<4x32xf32>
    %97 = arith.addf %95, %96 : vector<4x32xf32>
    %98 = math.tanh %97 : vector<4x32xf32>
    %99 = arith.mulf %94, %98 : vector<4x32xf32>
    %100 = arith.index_cast %80 : i32 to index
    %c0_29 = arith.constant 0 : index
    %101 = vector.load %arg10[%100, %c0_29] : memref<32x32xf32, #tpu.memory_space<vmem>>, vector<4x32xf32>
    tpu.vector_store %arg10[%100, %c0_29], %99 {strides = array<i32>} : memref<32x32xf32, #tpu.memory_space<vmem>>, vector<4x32xf32>,
    %c4_i32_30 = arith.constant 4 : i32
    %c4_i32_31 = arith.constant 4 : i32
    %102 = arith.muli %c4_i32_30, %c4_i32_31 : i32
    %103 = tpu.assume_multiple %102, 4 : i32
    %104 = arith.index_cast %103 : i32 to index
    %c0_32 = arith.constant 0 : index
    %105 = vector.load %arg11[%104, %c0_32] : memref<32x128xf32, #tpu.memory_space<vmem>>, vector<4x128xf32>
    %cst_33 = arith.constant dense<0.000000e+00> : vector<4x128xf32>
    %106 = tpu.matmul %99, %7, %cst_33 {dimension_numbers = #tpu.dot_dimension_numbers<[1], [0], [0], [1], [0, 0, 1, 1], [], []>} : vector<4x32xf32>, vector<32x128xf32>, vector<4x128xf32> -> vector<4x128xf32>
    %107 = arith.addf %105, %106 : vector<4x128xf32>
    %108 = arith.negf %107 : vector<4x128xf32>
    %109 = math.exp %108 : vector<4x128xf32>
    %cst_34 = arith.constant 1.000000e+00 : f32
    %110 = vector.broadcast %cst_34 : f32 to vector<4x128xf32>
    %111 = arith.addf %110, %109 : vector<4x128xf32>
    %112 = arith.divf %110, %111 : vector<4x128xf32>
    %113 = math.tanh %107 : vector<4x128xf32>
    %114 = vector.extract_strided_slice %112 {offsets = [0, 0], sizes = [4, 32], strides = [1, 1]} : vector<4x128xf32> to vector<4x32xf32>
    %115 = vector.extract_strided_slice %112 {offsets = [0, 32], sizes = [4, 32], strides = [1, 1]} : vector<4x128xf32> to vector<4x32xf32>
    %116 = vector.extract_strided_slice %113 {offsets = [0, 64], sizes = [4, 32], strides = [1, 1]} : vector<4x128xf32> to vector<4x32xf32>
    %117 = vector.extract_strided_slice %112 {offsets = [0, 96], sizes = [4, 32], strides = [1, 1]} : vector<4x128xf32> to vector<4x32xf32>
    %118 = arith.mulf %115, %97 : vector<4x32xf32>
    %119 = arith.mulf %114, %116 : vector<4x32xf32>
    %120 = arith.addf %118, %119 : vector<4x32xf32>
    %121 = math.tanh %120 : vector<4x32xf32>
    %122 = arith.mulf %117, %121 : vector<4x32xf32>
    %123 = arith.index_cast %103 : i32 to index
    %c0_35 = arith.constant 0 : index
    %124 = vector.load %arg10[%123, %c0_35] : memref<32x32xf32, #tpu.memory_space<vmem>>, vector<4x32xf32>
    tpu.vector_store %arg10[%123, %c0_35], %122 {strides = array<i32>} : memref<32x32xf32, #tpu.memory_space<vmem>>, vector<4x32xf32>,
    %c5_i32 = arith.constant 5 : i32
    %c4_i32_36 = arith.constant 4 : i32
    %125 = arith.muli %c5_i32, %c4_i32_36 : i32
    %126 = tpu.assume_multiple %125, 4 : i32
    %127 = arith.index_cast %126 : i32 to index
    %c0_37 = arith.constant 0 : index
    %128 = vector.load %arg11[%127, %c0_37] : memref<32x128xf32, #tpu.memory_space<vmem>>, vector<4x128xf32>
    %cst_38 = arith.constant dense<0.000000e+00> : vector<4x128xf32>
    %129 = tpu.matmul %122, %7, %cst_38 {dimension_numbers = #tpu.dot_dimension_numbers<[1], [0], [0], [1], [0, 0, 1, 1], [], []>} : vector<4x32xf32>, vector<32x128xf32>, vector<4x128xf32> -> vector<4x128xf32>
    %130 = arith.addf %128, %129 : vector<4x128xf32>
    %131 = arith.negf %130 : vector<4x128xf32>
    %132 = math.exp %131 : vector<4x128xf32>
    %cst_39 = arith.constant 1.000000e+00 : f32
    %133 = vector.broadcast %cst_39 : f32 to vector<4x128xf32>
    %134 = arith.addf %133, %132 : vector<4x128xf32>
    %135 = arith.divf %133, %134 : vector<4x128xf32>
    %136 = math.tanh %130 : vector<4x128xf32>
    %137 = vector.extract_strided_slice %135 {offsets = [0, 0], sizes = [4, 32], strides = [1, 1]} : vector<4x128xf32> to vector<4x32xf32>
    %138 = vector.extract_strided_slice %135 {offsets = [0, 32], sizes = [4, 32], strides = [1, 1]} : vector<4x128xf32> to vector<4x32xf32>
    %139 = vector.extract_strided_slice %136 {offsets = [0, 64], sizes = [4, 32], strides = [1, 1]} : vector<4x128xf32> to vector<4x32xf32>
    %140 = vector.extract_strided_slice %135 {offsets = [0, 96], sizes = [4, 32], strides = [1, 1]} : vector<4x128xf32> to vector<4x32xf32>
    %141 = arith.mulf %138, %120 : vector<4x32xf32>
    %142 = arith.mulf %137, %139 : vector<4x32xf32>
    %143 = arith.addf %141, %142 : vector<4x32xf32>
    %144 = math.tanh %143 : vector<4x32xf32>
    %145 = arith.mulf %140, %144 : vector<4x32xf32>
    %146 = arith.index_cast %126 : i32 to index
    %c0_40 = arith.constant 0 : index
    %147 = vector.load %arg10[%146, %c0_40] : memref<32x32xf32, #tpu.memory_space<vmem>>, vector<4x32xf32>
    tpu.vector_store %arg10[%146, %c0_40], %145 {strides = array<i32>} : memref<32x32xf32, #tpu.memory_space<vmem>>, vector<4x32xf32>,
    %c6_i32 = arith.constant 6 : i32
    %c4_i32_41 = arith.constant 4 : i32
    %148 = arith.muli %c6_i32, %c4_i32_41 : i32
    %149 = tpu.assume_multiple %148, 4 : i32
    %150 = arith.index_cast %149 : i32 to index
    %c0_42 = arith.constant 0 : index
    %151 = vector.load %arg11[%150, %c0_42] : memref<32x128xf32, #tpu.memory_space<vmem>>, vector<4x128xf32>
    %cst_43 = arith.constant dense<0.000000e+00> : vector<4x128xf32>
    %152 = tpu.matmul %145, %7, %cst_43 {dimension_numbers = #tpu.dot_dimension_numbers<[1], [0], [0], [1], [0, 0, 1, 1], [], []>} : vector<4x32xf32>, vector<32x128xf32>, vector<4x128xf32> -> vector<4x128xf32>
    %153 = arith.addf %151, %152 : vector<4x128xf32>
    %154 = arith.negf %153 : vector<4x128xf32>
    %155 = math.exp %154 : vector<4x128xf32>
    %cst_44 = arith.constant 1.000000e+00 : f32
    %156 = vector.broadcast %cst_44 : f32 to vector<4x128xf32>
    %157 = arith.addf %156, %155 : vector<4x128xf32>
    %158 = arith.divf %156, %157 : vector<4x128xf32>
    %159 = math.tanh %153 : vector<4x128xf32>
    %160 = vector.extract_strided_slice %158 {offsets = [0, 0], sizes = [4, 32], strides = [1, 1]} : vector<4x128xf32> to vector<4x32xf32>
    %161 = vector.extract_strided_slice %158 {offsets = [0, 32], sizes = [4, 32], strides = [1, 1]} : vector<4x128xf32> to vector<4x32xf32>
    %162 = vector.extract_strided_slice %159 {offsets = [0, 64], sizes = [4, 32], strides = [1, 1]} : vector<4x128xf32> to vector<4x32xf32>
    %163 = vector.extract_strided_slice %158 {offsets = [0, 96], sizes = [4, 32], strides = [1, 1]} : vector<4x128xf32> to vector<4x32xf32>
    %164 = arith.mulf %161, %143 : vector<4x32xf32>
    %165 = arith.mulf %160, %162 : vector<4x32xf32>
    %166 = arith.addf %164, %165 : vector<4x32xf32>
    %167 = math.tanh %166 : vector<4x32xf32>
    %168 = arith.mulf %163, %167 : vector<4x32xf32>
    %169 = arith.index_cast %149 : i32 to index
    %c0_45 = arith.constant 0 : index
    %170 = vector.load %arg10[%169, %c0_45] : memref<32x32xf32, #tpu.memory_space<vmem>>, vector<4x32xf32>
    tpu.vector_store %arg10[%169, %c0_45], %168 {strides = array<i32>} : memref<32x32xf32, #tpu.memory_space<vmem>>, vector<4x32xf32>,
    %c7_i32 = arith.constant 7 : i32
    %c4_i32_46 = arith.constant 4 : i32
    %171 = arith.muli %c7_i32, %c4_i32_46 : i32
    %172 = tpu.assume_multiple %171, 4 : i32
    %173 = arith.index_cast %172 : i32 to index
    %c0_47 = arith.constant 0 : index
    %174 = vector.load %arg11[%173, %c0_47] : memref<32x128xf32, #tpu.memory_space<vmem>>, vector<4x128xf32>
    %cst_48 = arith.constant dense<0.000000e+00> : vector<4x128xf32>
    %175 = tpu.matmul %168, %7, %cst_48 {dimension_numbers = #tpu.dot_dimension_numbers<[1], [0], [0], [1], [0, 0, 1, 1], [], []>} : vector<4x32xf32>, vector<32x128xf32>, vector<4x128xf32> -> vector<4x128xf32>
    %176 = arith.addf %174, %175 : vector<4x128xf32>
    %177 = arith.negf %176 : vector<4x128xf32>
    %178 = math.exp %177 : vector<4x128xf32>
    %cst_49 = arith.constant 1.000000e+00 : f32
    %179 = vector.broadcast %cst_49 : f32 to vector<4x128xf32>
    %180 = arith.addf %179, %178 : vector<4x128xf32>
    %181 = arith.divf %179, %180 : vector<4x128xf32>
    %182 = math.tanh %176 : vector<4x128xf32>
    %183 = vector.extract_strided_slice %181 {offsets = [0, 0], sizes = [4, 32], strides = [1, 1]} : vector<4x128xf32> to vector<4x32xf32>
    %184 = vector.extract_strided_slice %181 {offsets = [0, 32], sizes = [4, 32], strides = [1, 1]} : vector<4x128xf32> to vector<4x32xf32>
    %185 = vector.extract_strided_slice %182 {offsets = [0, 64], sizes = [4, 32], strides = [1, 1]} : vector<4x128xf32> to vector<4x32xf32>
    %186 = vector.extract_strided_slice %181 {offsets = [0, 96], sizes = [4, 32], strides = [1, 1]} : vector<4x128xf32> to vector<4x32xf32>
    %187 = arith.mulf %184, %166 : vector<4x32xf32>
    %188 = arith.mulf %183, %185 : vector<4x32xf32>
    %189 = arith.addf %187, %188 : vector<4x32xf32>
    %190 = math.tanh %189 : vector<4x32xf32>
    %191 = arith.mulf %186, %190 : vector<4x32xf32>
    %192 = arith.index_cast %172 : i32 to index
    %c0_50 = arith.constant 0 : index
    %193 = vector.load %arg10[%192, %c0_50] : memref<32x32xf32, #tpu.memory_space<vmem>>, vector<4x32xf32>
    tpu.vector_store %arg10[%192, %c0_50], %191 {strides = array<i32>} : memref<32x32xf32, #tpu.memory_space<vmem>>, vector<4x32xf32>,
    %c8_i32 = arith.constant 8 : i32
    %c0_51 = arith.constant 0 : index
    %c0_52 = arith.constant 0 : index
    %194 = vector.load %arg10[%c0_51, %c0_52] : memref<32x32xf32, #tpu.memory_space<vmem>>, vector<32x32xf32>
    %c0_53 = arith.constant 0 : index
    %c0_54 = arith.constant 0 : index
    %195 = vector.load %arg4[%c0_53, %c0_54] : memref<32x128xf32, #tpu.memory_space<vmem>>, vector<32x128xf32>
    %cst_55 = arith.constant dense<0.000000e+00> : vector<32x128xf32>
    %196 = tpu.matmul %194, %195, %cst_55 {dimension_numbers = #tpu.dot_dimension_numbers<[1], [0], [0], [1], [0, 0, 1, 1], [], []>} : vector<32x32xf32>, vector<32x128xf32>, vector<32x128xf32> -> vector<32x128xf32>
    %c0_56 = arith.constant 0 : index
    %c0_57 = arith.constant 0 : index
    %197 = vector.load %arg6[%c0_56, %c0_57] : memref<1x128xf32, #tpu.memory_space<vmem>>, vector<1x128xf32>
    %198 = vector.broadcast %197 : vector<1x128xf32> to vector<32x128xf32>
    %199 = arith.addf %196, %198 : vector<32x128xf32>
    %c0_58 = arith.constant 0 : index
    %c0_59 = arith.constant 0 : index
    %200 = vector.load %arg11[%c0_58, %c0_59] : memref<32x128xf32, #tpu.memory_space<vmem>>, vector<32x128xf32>
    tpu.vector_store %arg11[%c0_58, %c0_59], %199 {strides = array<i32>} : memref<32x128xf32, #tpu.memory_space<vmem>>, vector<32x128xf32>,
    %c0_60 = arith.constant 0 : index
    %c0_61 = arith.constant 0 : index
    %201 = vector.load %arg5[%c0_60, %c0_61] : memref<32x128xf32, #tpu.memory_space<vmem>>, vector<32x128xf32>
    %cst_62 = arith.constant 0.000000e+00 : f32
    %202 = vector.broadcast %cst_62 : f32 to vector<4x32xf32>
    %cst_63 = arith.constant 0.000000e+00 : f32
    %203 = vector.broadcast %cst_63 : f32 to vector<4x32xf32>
    %c0_i32_64 = arith.constant 0 : i32
    %c4_i32_65 = arith.constant 4 : i32
    %204 = arith.muli %c0_i32_64, %c4_i32_65 : i32
    %205 = tpu.assume_multiple %204, 4 : i32
    %206 = arith.index_cast %205 : i32 to index
    %c0_66 = arith.constant 0 : index
    %207 = vector.load %arg11[%206, %c0_66] : memref<32x128xf32, #tpu.memory_space<vmem>>, vector<4x128xf32>
    %cst_67 = arith.constant dense<0.000000e+00> : vector<4x128xf32>
    %208 = tpu.matmul %202, %201, %cst_67 {dimension_numbers = #tpu.dot_dimension_numbers<[1], [0], [0], [1], [0, 0, 1, 1], [], []>} : vector<4x32xf32>, vector<32x128xf32>, vector<4x128xf32> -> vector<4x128xf32>
    %209 = arith.addf %207, %208 : vector<4x128xf32>
    %210 = arith.negf %209 : vector<4x128xf32>
    %211 = math.exp %210 : vector<4x128xf32>
    %cst_68 = arith.constant 1.000000e+00 : f32
    %212 = vector.broadcast %cst_68 : f32 to vector<4x128xf32>
    %213 = arith.addf %212, %211 : vector<4x128xf32>
    %214 = arith.divf %212, %213 : vector<4x128xf32>
    %215 = math.tanh %209 : vector<4x128xf32>
    %216 = vector.extract_strided_slice %214 {offsets = [0, 0], sizes = [4, 32], strides = [1, 1]} : vector<4x128xf32> to vector<4x32xf32>
    %217 = vector.extract_strided_slice %214 {offsets = [0, 32], sizes = [4, 32], strides = [1, 1]} : vector<4x128xf32> to vector<4x32xf32>
    %218 = vector.extract_strided_slice %215 {offsets = [0, 64], sizes = [4, 32], strides = [1, 1]} : vector<4x128xf32> to vector<4x32xf32>
    %219 = vector.extract_strided_slice %214 {offsets = [0, 96], sizes = [4, 32], strides = [1, 1]} : vector<4x128xf32> to vector<4x32xf32>
    %220 = arith.mulf %217, %203 : vector<4x32xf32>
    %221 = arith.mulf %216, %218 : vector<4x32xf32>
    %222 = arith.addf %220, %221 : vector<4x32xf32>
    %223 = math.tanh %222 : vector<4x32xf32>
    %224 = arith.mulf %219, %223 : vector<4x32xf32>
    %c1_i32_69 = arith.constant 1 : i32
    %c4_i32_70 = arith.constant 4 : i32
    %225 = arith.muli %c1_i32_69, %c4_i32_70 : i32
    %226 = tpu.assume_multiple %225, 4 : i32
    %227 = arith.index_cast %226 : i32 to index
    %c0_71 = arith.constant 0 : index
    %228 = vector.load %arg11[%227, %c0_71] : memref<32x128xf32, #tpu.memory_space<vmem>>, vector<4x128xf32>
    %cst_72 = arith.constant dense<0.000000e+00> : vector<4x128xf32>
    %229 = tpu.matmul %224, %201, %cst_72 {dimension_numbers = #tpu.dot_dimension_numbers<[1], [0], [0], [1], [0, 0, 1, 1], [], []>} : vector<4x32xf32>, vector<32x128xf32>, vector<4x128xf32> -> vector<4x128xf32>
    %230 = arith.addf %228, %229 : vector<4x128xf32>
    %231 = arith.negf %230 : vector<4x128xf32>
    %232 = math.exp %231 : vector<4x128xf32>
    %cst_73 = arith.constant 1.000000e+00 : f32
    %233 = vector.broadcast %cst_73 : f32 to vector<4x128xf32>
    %234 = arith.addf %233, %232 : vector<4x128xf32>
    %235 = arith.divf %233, %234 : vector<4x128xf32>
    %236 = math.tanh %230 : vector<4x128xf32>
    %237 = vector.extract_strided_slice %235 {offsets = [0, 0], sizes = [4, 32], strides = [1, 1]} : vector<4x128xf32> to vector<4x32xf32>
    %238 = vector.extract_strided_slice %235 {offsets = [0, 32], sizes = [4, 32], strides = [1, 1]} : vector<4x128xf32> to vector<4x32xf32>
    %239 = vector.extract_strided_slice %236 {offsets = [0, 64], sizes = [4, 32], strides = [1, 1]} : vector<4x128xf32> to vector<4x32xf32>
    %240 = vector.extract_strided_slice %235 {offsets = [0, 96], sizes = [4, 32], strides = [1, 1]} : vector<4x128xf32> to vector<4x32xf32>
    %241 = arith.mulf %238, %222 : vector<4x32xf32>
    %242 = arith.mulf %237, %239 : vector<4x32xf32>
    %243 = arith.addf %241, %242 : vector<4x32xf32>
    %244 = math.tanh %243 : vector<4x32xf32>
    %245 = arith.mulf %240, %244 : vector<4x32xf32>
    %c2_i32_74 = arith.constant 2 : i32
    %c4_i32_75 = arith.constant 4 : i32
    %246 = arith.muli %c2_i32_74, %c4_i32_75 : i32
    %247 = tpu.assume_multiple %246, 4 : i32
    %248 = arith.index_cast %247 : i32 to index
    %c0_76 = arith.constant 0 : index
    %249 = vector.load %arg11[%248, %c0_76] : memref<32x128xf32, #tpu.memory_space<vmem>>, vector<4x128xf32>
    %cst_77 = arith.constant dense<0.000000e+00> : vector<4x128xf32>
    %250 = tpu.matmul %245, %201, %cst_77 {dimension_numbers = #tpu.dot_dimension_numbers<[1], [0], [0], [1], [0, 0, 1, 1], [], []>} : vector<4x32xf32>, vector<32x128xf32>, vector<4x128xf32> -> vector<4x128xf32>
    %251 = arith.addf %249, %250 : vector<4x128xf32>
    %252 = arith.negf %251 : vector<4x128xf32>
    %253 = math.exp %252 : vector<4x128xf32>
    %cst_78 = arith.constant 1.000000e+00 : f32
    %254 = vector.broadcast %cst_78 : f32 to vector<4x128xf32>
    %255 = arith.addf %254, %253 : vector<4x128xf32>
    %256 = arith.divf %254, %255 : vector<4x128xf32>
    %257 = math.tanh %251 : vector<4x128xf32>
    %258 = vector.extract_strided_slice %256 {offsets = [0, 0], sizes = [4, 32], strides = [1, 1]} : vector<4x128xf32> to vector<4x32xf32>
    %259 = vector.extract_strided_slice %256 {offsets = [0, 32], sizes = [4, 32], strides = [1, 1]} : vector<4x128xf32> to vector<4x32xf32>
    %260 = vector.extract_strided_slice %257 {offsets = [0, 64], sizes = [4, 32], strides = [1, 1]} : vector<4x128xf32> to vector<4x32xf32>
    %261 = vector.extract_strided_slice %256 {offsets = [0, 96], sizes = [4, 32], strides = [1, 1]} : vector<4x128xf32> to vector<4x32xf32>
    %262 = arith.mulf %259, %243 : vector<4x32xf32>
    %263 = arith.mulf %258, %260 : vector<4x32xf32>
    %264 = arith.addf %262, %263 : vector<4x32xf32>
    %265 = math.tanh %264 : vector<4x32xf32>
    %266 = arith.mulf %261, %265 : vector<4x32xf32>
    %c3_i32_79 = arith.constant 3 : i32
    %c4_i32_80 = arith.constant 4 : i32
    %267 = arith.muli %c3_i32_79, %c4_i32_80 : i32
    %268 = tpu.assume_multiple %267, 4 : i32
    %269 = arith.index_cast %268 : i32 to index
    %c0_81 = arith.constant 0 : index
    %270 = vector.load %arg11[%269, %c0_81] : memref<32x128xf32, #tpu.memory_space<vmem>>, vector<4x128xf32>
    %cst_82 = arith.constant dense<0.000000e+00> : vector<4x128xf32>
    %271 = tpu.matmul %266, %201, %cst_82 {dimension_numbers = #tpu.dot_dimension_numbers<[1], [0], [0], [1], [0, 0, 1, 1], [], []>} : vector<4x32xf32>, vector<32x128xf32>, vector<4x128xf32> -> vector<4x128xf32>
    %272 = arith.addf %270, %271 : vector<4x128xf32>
    %273 = arith.negf %272 : vector<4x128xf32>
    %274 = math.exp %273 : vector<4x128xf32>
    %cst_83 = arith.constant 1.000000e+00 : f32
    %275 = vector.broadcast %cst_83 : f32 to vector<4x128xf32>
    %276 = arith.addf %275, %274 : vector<4x128xf32>
    %277 = arith.divf %275, %276 : vector<4x128xf32>
    %278 = math.tanh %272 : vector<4x128xf32>
    %279 = vector.extract_strided_slice %277 {offsets = [0, 0], sizes = [4, 32], strides = [1, 1]} : vector<4x128xf32> to vector<4x32xf32>
    %280 = vector.extract_strided_slice %277 {offsets = [0, 32], sizes = [4, 32], strides = [1, 1]} : vector<4x128xf32> to vector<4x32xf32>
    %281 = vector.extract_strided_slice %278 {offsets = [0, 64], sizes = [4, 32], strides = [1, 1]} : vector<4x128xf32> to vector<4x32xf32>
    %282 = vector.extract_strided_slice %277 {offsets = [0, 96], sizes = [4, 32], strides = [1, 1]} : vector<4x128xf32> to vector<4x32xf32>
    %283 = arith.mulf %280, %264 : vector<4x32xf32>
    %284 = arith.mulf %279, %281 : vector<4x32xf32>
    %285 = arith.addf %283, %284 : vector<4x32xf32>
    %286 = math.tanh %285 : vector<4x32xf32>
    %287 = arith.mulf %282, %286 : vector<4x32xf32>
    %c4_i32_84 = arith.constant 4 : i32
    %c4_i32_85 = arith.constant 4 : i32
    %288 = arith.muli %c4_i32_84, %c4_i32_85 : i32
    %289 = tpu.assume_multiple %288, 4 : i32
    %290 = arith.index_cast %289 : i32 to index
    %c0_86 = arith.constant 0 : index
    %291 = vector.load %arg11[%290, %c0_86] : memref<32x128xf32, #tpu.memory_space<vmem>>, vector<4x128xf32>
    %cst_87 = arith.constant dense<0.000000e+00> : vector<4x128xf32>
    %292 = tpu.matmul %287, %201, %cst_87 {dimension_numbers = #tpu.dot_dimension_numbers<[1], [0], [0], [1], [0, 0, 1, 1], [], []>} : vector<4x32xf32>, vector<32x128xf32>, vector<4x128xf32> -> vector<4x128xf32>
    %293 = arith.addf %291, %292 : vector<4x128xf32>
    %294 = arith.negf %293 : vector<4x128xf32>
    %295 = math.exp %294 : vector<4x128xf32>
    %cst_88 = arith.constant 1.000000e+00 : f32
    %296 = vector.broadcast %cst_88 : f32 to vector<4x128xf32>
    %297 = arith.addf %296, %295 : vector<4x128xf32>
    %298 = arith.divf %296, %297 : vector<4x128xf32>
    %299 = math.tanh %293 : vector<4x128xf32>
    %300 = vector.extract_strided_slice %298 {offsets = [0, 0], sizes = [4, 32], strides = [1, 1]} : vector<4x128xf32> to vector<4x32xf32>
    %301 = vector.extract_strided_slice %298 {offsets = [0, 32], sizes = [4, 32], strides = [1, 1]} : vector<4x128xf32> to vector<4x32xf32>
    %302 = vector.extract_strided_slice %299 {offsets = [0, 64], sizes = [4, 32], strides = [1, 1]} : vector<4x128xf32> to vector<4x32xf32>
    %303 = vector.extract_strided_slice %298 {offsets = [0, 96], sizes = [4, 32], strides = [1, 1]} : vector<4x128xf32> to vector<4x32xf32>
    %304 = arith.mulf %301, %285 : vector<4x32xf32>
    %305 = arith.mulf %300, %302 : vector<4x32xf32>
    %306 = arith.addf %304, %305 : vector<4x32xf32>
    %307 = math.tanh %306 : vector<4x32xf32>
    %308 = arith.mulf %303, %307 : vector<4x32xf32>
    %c5_i32_89 = arith.constant 5 : i32
    %c4_i32_90 = arith.constant 4 : i32
    %309 = arith.muli %c5_i32_89, %c4_i32_90 : i32
    %310 = tpu.assume_multiple %309, 4 : i32
    %311 = arith.index_cast %310 : i32 to index
    %c0_91 = arith.constant 0 : index
    %312 = vector.load %arg11[%311, %c0_91] : memref<32x128xf32, #tpu.memory_space<vmem>>, vector<4x128xf32>
    %cst_92 = arith.constant dense<0.000000e+00> : vector<4x128xf32>
    %313 = tpu.matmul %308, %201, %cst_92 {dimension_numbers = #tpu.dot_dimension_numbers<[1], [0], [0], [1], [0, 0, 1, 1], [], []>} : vector<4x32xf32>, vector<32x128xf32>, vector<4x128xf32> -> vector<4x128xf32>
    %314 = arith.addf %312, %313 : vector<4x128xf32>
    %315 = arith.negf %314 : vector<4x128xf32>
    %316 = math.exp %315 : vector<4x128xf32>
    %cst_93 = arith.constant 1.000000e+00 : f32
    %317 = vector.broadcast %cst_93 : f32 to vector<4x128xf32>
    %318 = arith.addf %317, %316 : vector<4x128xf32>
    %319 = arith.divf %317, %318 : vector<4x128xf32>
    %320 = math.tanh %314 : vector<4x128xf32>
    %321 = vector.extract_strided_slice %319 {offsets = [0, 0], sizes = [4, 32], strides = [1, 1]} : vector<4x128xf32> to vector<4x32xf32>
    %322 = vector.extract_strided_slice %319 {offsets = [0, 32], sizes = [4, 32], strides = [1, 1]} : vector<4x128xf32> to vector<4x32xf32>
    %323 = vector.extract_strided_slice %320 {offsets = [0, 64], sizes = [4, 32], strides = [1, 1]} : vector<4x128xf32> to vector<4x32xf32>
    %324 = vector.extract_strided_slice %319 {offsets = [0, 96], sizes = [4, 32], strides = [1, 1]} : vector<4x128xf32> to vector<4x32xf32>
    %325 = arith.mulf %322, %306 : vector<4x32xf32>
    %326 = arith.mulf %321, %323 : vector<4x32xf32>
    %327 = arith.addf %325, %326 : vector<4x32xf32>
    %328 = math.tanh %327 : vector<4x32xf32>
    %329 = arith.mulf %324, %328 : vector<4x32xf32>
    %c6_i32_94 = arith.constant 6 : i32
    %c4_i32_95 = arith.constant 4 : i32
    %330 = arith.muli %c6_i32_94, %c4_i32_95 : i32
    %331 = tpu.assume_multiple %330, 4 : i32
    %332 = arith.index_cast %331 : i32 to index
    %c0_96 = arith.constant 0 : index
    %333 = vector.load %arg11[%332, %c0_96] : memref<32x128xf32, #tpu.memory_space<vmem>>, vector<4x128xf32>
    %cst_97 = arith.constant dense<0.000000e+00> : vector<4x128xf32>
    %334 = tpu.matmul %329, %201, %cst_97 {dimension_numbers = #tpu.dot_dimension_numbers<[1], [0], [0], [1], [0, 0, 1, 1], [], []>} : vector<4x32xf32>, vector<32x128xf32>, vector<4x128xf32> -> vector<4x128xf32>
    %335 = arith.addf %333, %334 : vector<4x128xf32>
    %336 = arith.negf %335 : vector<4x128xf32>
    %337 = math.exp %336 : vector<4x128xf32>
    %cst_98 = arith.constant 1.000000e+00 : f32
    %338 = vector.broadcast %cst_98 : f32 to vector<4x128xf32>
    %339 = arith.addf %338, %337 : vector<4x128xf32>
    %340 = arith.divf %338, %339 : vector<4x128xf32>
    %341 = math.tanh %335 : vector<4x128xf32>
    %342 = vector.extract_strided_slice %340 {offsets = [0, 0], sizes = [4, 32], strides = [1, 1]} : vector<4x128xf32> to vector<4x32xf32>
    %343 = vector.extract_strided_slice %340 {offsets = [0, 32], sizes = [4, 32], strides = [1, 1]} : vector<4x128xf32> to vector<4x32xf32>
    %344 = vector.extract_strided_slice %341 {offsets = [0, 64], sizes = [4, 32], strides = [1, 1]} : vector<4x128xf32> to vector<4x32xf32>
    %345 = vector.extract_strided_slice %340 {offsets = [0, 96], sizes = [4, 32], strides = [1, 1]} : vector<4x128xf32> to vector<4x32xf32>
    %346 = arith.mulf %343, %327 : vector<4x32xf32>
    %347 = arith.mulf %342, %344 : vector<4x32xf32>
    %348 = arith.addf %346, %347 : vector<4x32xf32>
    %349 = math.tanh %348 : vector<4x32xf32>
    %350 = arith.mulf %345, %349 : vector<4x32xf32>
    %c7_i32_99 = arith.constant 7 : i32
    %c4_i32_100 = arith.constant 4 : i32
    %351 = arith.muli %c7_i32_99, %c4_i32_100 : i32
    %352 = tpu.assume_multiple %351, 4 : i32
    %353 = arith.index_cast %352 : i32 to index
    %c0_101 = arith.constant 0 : index
    %354 = vector.load %arg11[%353, %c0_101] : memref<32x128xf32, #tpu.memory_space<vmem>>, vector<4x128xf32>
    %cst_102 = arith.constant dense<0.000000e+00> : vector<4x128xf32>
    %355 = tpu.matmul %350, %201, %cst_102 {dimension_numbers = #tpu.dot_dimension_numbers<[1], [0], [0], [1], [0, 0, 1, 1], [], []>} : vector<4x32xf32>, vector<32x128xf32>, vector<4x128xf32> -> vector<4x128xf32>
    %356 = arith.addf %354, %355 : vector<4x128xf32>
    %357 = arith.negf %356 : vector<4x128xf32>
    %358 = math.exp %357 : vector<4x128xf32>
    %cst_103 = arith.constant 1.000000e+00 : f32
    %359 = vector.broadcast %cst_103 : f32 to vector<4x128xf32>
    %360 = arith.addf %359, %358 : vector<4x128xf32>
    %361 = arith.divf %359, %360 : vector<4x128xf32>
    %362 = math.tanh %356 : vector<4x128xf32>
    %363 = vector.extract_strided_slice %361 {offsets = [0, 0], sizes = [4, 32], strides = [1, 1]} : vector<4x128xf32> to vector<4x32xf32>
    %364 = vector.extract_strided_slice %361 {offsets = [0, 32], sizes = [4, 32], strides = [1, 1]} : vector<4x128xf32> to vector<4x32xf32>
    %365 = vector.extract_strided_slice %362 {offsets = [0, 64], sizes = [4, 32], strides = [1, 1]} : vector<4x128xf32> to vector<4x32xf32>
    %366 = vector.extract_strided_slice %361 {offsets = [0, 96], sizes = [4, 32], strides = [1, 1]} : vector<4x128xf32> to vector<4x32xf32>
    %367 = arith.mulf %364, %348 : vector<4x32xf32>
    %368 = arith.mulf %363, %365 : vector<4x32xf32>
    %369 = arith.addf %367, %368 : vector<4x32xf32>
    %370 = math.tanh %369 : vector<4x32xf32>
    %371 = arith.mulf %366, %370 : vector<4x32xf32>
    %c8_i32_104 = arith.constant 8 : i32
    %c0_105 = arith.constant 0 : index
    %c0_106 = arith.constant 0 : index
    %372 = vector.load %arg7[%c0_105, %c0_106] : memref<32x8xf32, #tpu.memory_space<vmem>>, vector<32x8xf32>
    %cst_107 = arith.constant dense<0.000000e+00> : vector<4x8xf32>
    %373 = tpu.matmul %371, %372, %cst_107 {dimension_numbers = #tpu.dot_dimension_numbers<[1], [0], [0], [1], [0, 0, 1, 1], [], []>} : vector<4x32xf32>, vector<32x8xf32>, vector<4x8xf32> -> vector<4x8xf32>
    %c0_108 = arith.constant 0 : index
    %c0_109 = arith.constant 0 : index
    %374 = vector.load %arg8[%c0_108, %c0_109] : memref<1x8xf32, #tpu.memory_space<vmem>>, vector<1x8xf32>
    %375 = vector.broadcast %374 : vector<1x8xf32> to vector<4x8xf32>
    %376 = arith.addf %373, %375 : vector<4x8xf32>
    %377 = math.tanh %376 : vector<4x8xf32>
    %c0_110 = arith.constant 0 : index
    %c0_111 = arith.constant 0 : index
    %378 = vector.load %arg9[%c0_110, %c0_111] : memref<4x8xf32, #tpu.memory_space<vmem>>, vector<4x8xf32>
    tpu.vector_store %arg9[%c0_110, %c0_111], %377 {strides = array<i32>} : memref<4x8xf32, #tpu.memory_space<vmem>>, vector<4x8xf32>,
    return
  }
}

</mosaic_0001>

<llo_original>
// kernel: tpu_custom_call.1
$region0: #{tpu_custom_call.1}
  #allocation0 [shape = 'u32[]', space=smem, size = 0x4, offset = 0x4, fixed_abs, tag = 'smem constant byte address 0x4 - core index']
  #allocation1 [shape = 'u32[144,128]{1,0:T(1,128)}', space=vmem, size = 0x12000, scoped, tag = 'internal scratch']
  #allocation2 [shape = 'f32[32,32]{1,0:T(8,128)}', space=vmem, size = 0x4000, scoped, tag = 'scratch operand']
  #allocation3 [shape = 'f32[32,128]{1,0:T(8,128)}', space=vmem, size = 0x4000, scoped, tag = 'scratch operand']
  %s0 = inlined_call_operand.vmem [shape: f32[32,16], index: 0, kind: input, shape index: {}]
  %s1 = inlined_call_operand.hbm [shape: f32[16,128], index: 1, kind: input, shape index: {}]
  %s2 = inlined_call_operand.vmem [shape: f32[32,128], index: 2, kind: input, shape index: {}]
  %s3 = inlined_call_operand.vmem [shape: f32[1,128], index: 3, kind: input, shape index: {}]
  %s4 = inlined_call_operand.vmem [shape: f32[32,128], index: 4, kind: input, shape index: {}]
  %s5 = inlined_call_operand.vmem [shape: f32[32,128], index: 5, kind: input, shape index: {}]
  %s6 = inlined_call_operand.vmem [shape: f32[1,128], index: 6, kind: input, shape index: {}]
  %s7 = inlined_call_operand.vmem [shape: f32[32,8], index: 7, kind: input, shape index: {}]
  %s8 = inlined_call_operand.vmem [shape: f32[1,8], index: 8, kind: input, shape index: {}]
  %s9 = inlined_call_operand.hbm [shape: f32[4,8], index: 9, kind: output, shape index: {}]
  %s10 = sld [smem:[#allocation0]]
  $region50: #{tpu_custom_call.1} parent=0
    _
  %s12 = ssub.s32 1, %s10
  %s13 = scalar_select 0, %s12, %s10
  $region1: #{tpu_custom_call.1} parent=0
    #allocation4 [shape = 'u8[8192]{0}', space=vmem, size = 0x2000, scoped, tag = 'input window, operand 1, single buffered']
    #allocation5 [shape = 's32[1]{0}', space=sflag, size = 0x4, scoped, tag = 'scoped memory for tpu_custom_call.1']
    #allocation6 [shape = 's32[1]{0}', space=sflag, size = 0x4, scoped, tag = 'scoped memory for tpu_custom_call.1']
    #allocation7 [shape = 'u8[2048]{0}', space=vmem, size = 0x800, scoped, tag = 'output window, operand 0, single buffered']
    %14 = vsyncpa [#allocation5], 0
    %15 = vsyncpa [#allocation6], 0
    // Predicated region
    $region2: #{tpu_custom_call.1} parent=1 // pred_check
      _
    $region3: #{tpu_custom_call.1} parent=1 // pred_check_branch
      %17 = sbr.rel (0) target = $region5
    $region4: #{tpu_custom_call.1} parent=1 // pred_region
      _
    $region5: #{tpu_custom_call.1} parent=1 // pred_fallthru
      _
    // Predicated region
    $region6: #{tpu_custom_call.1} parent=1 // pred_check
      _
    $region7: #{tpu_custom_call.1} parent=1 // pred_check_branch
      %19 = sbr.rel (0) target = $region9
    $region8: #{tpu_custom_call.1} parent=1 // pred_region
      %s21 = ssub.s32 256, 256
      %22 = vsyncadd [#allocation5], %s21
      %s23 = sshll.u32 [#allocation4], 4
      %s24 = int_to_ptr.vmem [resolvable:$true] %s23
      %29 = dma.hbm_to_vmem [thread:$0]  %s1, 256, %s24, [#allocation5], 128, 128, 8
    $region9: #{tpu_custom_call.1} parent=1 // pred_fallthru
      _
    // Predicated region
    $region10: #{tpu_custom_call.1} parent=1 // pred_check
      _
    $region11: #{tpu_custom_call.1} parent=1 // pred_check_branch
      %31 = sbr.rel (0) target = $region13
    $region12: #{tpu_custom_call.1} parent=1 // pred_region
      _
    $region13: #{tpu_custom_call.1} parent=1 // pred_fallthru
      _
    // Predicated region
    $region14: #{tpu_custom_call.1} parent=1 // pred_check
      _
    $region15: #{tpu_custom_call.1} parent=1 // pred_check_branch
      %33 = sbr.rel (0) target = $region17
    $region16: #{tpu_custom_call.1} parent=1 // pred_region
      _
    $region17: #{tpu_custom_call.1} parent=1 // pred_fallthru
      _
    // Predicated region
    $region18: #{tpu_custom_call.1} parent=1 // pred_check
      _
    $region19: #{tpu_custom_call.1} parent=1 // pred_check_branch
      %35 = sbr.rel (0) target = $region21
    $region20: #{tpu_custom_call.1} parent=1 // pred_region
      _
    $region21: #{tpu_custom_call.1} parent=1 // pred_fallthru
      _
    // Predicated region
    $region22: #{tpu_custom_call.1} parent=1 // pred_check
      _
    $region23: #{tpu_custom_call.1} parent=1 // pred_check_branch
      %37 = sbr.rel (0) target = $region25
    $region24: #{tpu_custom_call.1} parent=1 // pred_region
      _
    $region25: #{tpu_custom_call.1} parent=1 // pred_fallthru
      _
    // Predicated region
    $region26: #{tpu_custom_call.1} parent=1 // pred_check
      _
    $region27: #{tpu_custom_call.1} parent=1 // pred_check_branch
      %39 = sbr.rel (0) target = $region29
    $region28: #{tpu_custom_call.1} parent=1 // pred_region
      _
    $region29: #{tpu_custom_call.1} parent=1 // pred_fallthru
      _
    // Predicated region
    $region30: #{tpu_custom_call.1} parent=1 // pred_check
      _
    $region31: #{tpu_custom_call.1} parent=1 // pred_check_branch
      %41 = sbr.rel (0) target = $region33
    $region32: #{tpu_custom_call.1} parent=1 // pred_region
      _
    $region33: #{tpu_custom_call.1} parent=1 // pred_fallthru
      _
    // Predicated region
    $region34: #{tpu_custom_call.1} parent=1 // pred_check
      _
    $region35: #{tpu_custom_call.1} parent=1 // pred_check_branch
      %43 = sbr.rel (0) target = $region37
    $region36: #{tpu_custom_call.1} parent=1 // pred_region
      _
    $region37: #{tpu_custom_call.1} parent=1 // pred_fallthru
      _
    // Predicated region
    $region38: #{tpu_custom_call.1} parent=1 // pred_check
      _
    $region39: #{tpu_custom_call.1} parent=1 // pred_check_branch
      %45 = sbr.rel (0) target = $region41
    $region40: #{tpu_custom_call.1} parent=1 // pred_region
      %46 = dma.done [#allocation5], 256
    $region41: #{tpu_custom_call.1} parent=1 // pred_fallthru
      _
    %v47 = vld [vmem:[%s0] sm:$0xff]
    %v48 = vld [vmem:[%s0 + $0x8] sm:$0xff]
    %v49 = vld [vmem:[%s0 + $0x10] sm:$0xff]
    %v50 = vld [vmem:[%s0 + $0x18] sm:$0xff]
    %v51 = vld [vmem:[#allocation4] sm:$0xff]
    %v52 = vld [vmem:[#allocation4 + $0x8] sm:$0xff]
    %v53 = vld [vmem:[%s3] sm:$0x1]
    %v55 = vlaneseq
    %v56 = vshrl.u32 %v55, 7
    %v57 = vsub.s32 0, %v56
    %v58 = vrot.slane %v53, %v57
    %vm60 = vcmask 130048
    %v62 = vsel %vm60, %v47, 0
    %v65 = vsel %vm60, %v48, 0
    %v68 = vsel %vm60, %v49, 0
    %v71 = vsel %vm60, %v50, 0
    %73 = vmatprep.subr.mxu0 0.0
    %74 = vmatpush1.msra.mxu0 %v51
    %75 = vmatprep.subr.mxu0 0.0
    %76 = vmatpush1.msra.mxu0 %v52
    %77 = vmatprep.subr.mxu0 0.0
    %78 = vmatpush1.msra.mxu0 0.0
    %79 = vmatprep.subr.mxu0 0.0
    %80 = vmatpush1.msra.mxu0 0.0
    %81 = vmatprep.subr.mxu0 0.0
    %82 = vmatpush1.msra.mxu0 0.0
    %83 = vmatprep.subr.mxu0 0.0
    %84 = vmatpush1.msra.mxu0 0.0
    %85 = vmatprep.subr.mxu0 0.0
    %86 = vmatpush1.msra.mxu0 0.0
    %87 = vmatprep.subr.mxu0 0.0
    %88 = vmatpush1.msra.mxu0 0.0
    %89 = vmatprep.subr.mxu0 0.0
    %90 = vmatpush1.msra.mxu0 0.0
    %91 = vmatprep.subr.mxu0 0.0
    %92 = vmatpush1.msra.mxu0 0.0
    %93 = vmatprep.subr.mxu0 0.0
    %94 = vmatpush1.msra.mxu0 0.0
    %95 = vmatprep.subr.mxu0 0.0
    %96 = vmatpush1.msra.mxu0 0.0
    %97 = vmatprep.subr.mxu0 0.0
    %98 = vmatpush1.msra.mxu0 0.0
    %99 = vmatprep.subr.mxu0 0.0
    %100 = vmatpush1.msra.mxu0 0.0
    %101 = vmatprep.subr.mxu0 0.0
    %102 = vmatpush1.msra.mxu0 0.0
    %103 = vmatprep.subr.mxu0 0.0
    %104 = vmatpush1.msra.mxu0 0.0
    %105 = vmatprep.subr.mxu0 0.0
    %106 = vmatpush1.msra.mxu0 0.0
    %107 = vmatprep.subr.mxu0 0.0
    %108 = vmatpush1.msra.mxu0 0.0
    %109 = vmatprep.subr.mxu0 0.0
    %110 = vmatpush1.msra.mxu0 0.0
    %111 = vmatprep.subr.mxu0 0.0
    %112 = vmatpush1.msra.mxu0 0.0
    %113 = vmatprep.subr.mxu0 0.0
    %114 = vmatpush1.msra.mxu0 0.0
    %115 = vmatprep.subr.mxu0 0.0
    %116 = vmatpush1.msra.mxu0 0.0
    %117 = vmatprep.subr.mxu0 0.0
    %118 = vmatpush1.msra.mxu0 0.0
    %119 = vmatprep.subr.mxu0 0.0
    %120 = vmatpush1.msra.mxu0 0.0
    %121 = vmatprep.subr.mxu0 0.0
    %122 = vmatpush1.msra.mxu0 0.0
    %123 = vmatprep.subr.mxu0 0.0
    %124 = vmatpush1.msra.mxu0 0.0
    %125 = vmatprep.subr.mxu0 0.0
    %126 = vmatpush1.msra.mxu0 0.0
    %127 = vmatprep.subr.mxu0 0.0
    %128 = vmatpush1.msra.mxu0 0.0
    %129 = vmatprep.subr.mxu0 0.0
    %130 = vmatpush1.msra.mxu0 0.0
    %131 = vmatprep.subr.mxu0 0.0
    %132 = vmatpush1.msra.mxu0 0.0
    %133 = vmatprep.subr.mxu0 0.0
    %134 = vmatpush1.msra.mxu0 0.0
    %135 = vmatprep.subr.mxu0 0.0
    %136 = vmatpush1.msra.mxu0 0.0
    %137 = vmatprep.mubr.f32.mxu0 0.0
    %138 = vmatmul.mubr.f32.gmra.mrb[0].mxu0 %v62
    %v139 = vpop.f32.mrb[0].mxu0
    %v140 = vadd.f32 %v58, %v139
    %v141 = vpop.f32.mrb[0].mxu0
    %142 = vmatprep.mubr.f32.mxu0 0.0
    %143 = vmatmul.mubr.f32.gmra.mrb[0].mxu0 %v65
    %v144 = vpop.f32.mrb[0].mxu0
    %v145 = vadd.f32 %v58, %v144
    %v146 = vpop.f32.mrb[0].mxu0
    %147 = vmatprep.mubr.f32.mxu0 0.0
    %148 = vmatmul.mubr.f32.gmra.mrb[0].mxu0 %v68
    %v149 = vpop.f32.mrb[0].mxu0
    %v150 = vadd.f32 %v58, %v149
    %v151 = vpop.f32.mrb[0].mxu0
    %152 = vmatprep.mubr.f32.mxu0 0.0
    %153 = vmatmul.mubr.f32.gmra.mrb[0].mxu0 %v71
    %v154 = vpop.f32.mrb[0].mxu0
    %v155 = vadd.f32 %v58, %v154
    %v156 = vpop.f32.mrb[0].mxu0
    %157 = vdwg.mxu0
    %158 = vst [vmem:[#allocation3] sm:$0xff] %v140
    %159 = vst [vmem:[#allocation3 + $0x8] sm:$0xff] %v145
    %160 = vst [vmem:[#allocation3 + $0x10] sm:$0xff] %v150
    %161 = vst [vmem:[#allocation3 + $0x18] sm:$0xff] %v155
    %v162 = vld [vmem:[%s2] sm:$0xff]
    %v163 = vld [vmem:[%s2 + $0x8] sm:$0xff]
    %v164 = vld [vmem:[%s2 + $0x10] sm:$0xff]
    %v165 = vld [vmem:[%s2 + $0x18] sm:$0xff]
    %v166 = vld [vmem:[#allocation3] sm:$0xf]
    %vm167 = vcmask 261120
    %v169 = vsel %vm167, 0.0, 0
    %171 = vmatprep.subr.mxu0 0.0
    %172 = vmatpush1.msra.mxu0 %v162
    %173 = vmatprep.subr.mxu0 0.0
    %174 = vmatpush1.msra.mxu0 %v163
    %175 = vmatprep.subr.mxu0 0.0
    %176 = vmatpush1.msra.mxu0 %v164
    %177 = vmatprep.subr.mxu0 0.0
    %178 = vmatpush1.msra.mxu0 %v165
    %179 = vmatprep.subr.mxu0 0.0
    %180 = vmatpush1.msra.mxu0 0.0
    %181 = vmatprep.subr.mxu0 0.0
    %182 = vmatpush1.msra.mxu0 0.0
    %183 = vmatprep.subr.mxu0 0.0
    %184 = vmatpush1.msra.mxu0 0.0
    %185 = vmatprep.subr.mxu0 0.0
    %186 = vmatpush1.msra.mxu0 0.0
    %187 = vmatprep.subr.mxu0 0.0
    %188 = vmatpush1.msra.mxu0 0.0
    %189 = vmatprep.subr.mxu0 0.0
    %190 = vmatpush1.msra.mxu0 0.0
    %191 = vmatprep.subr.mxu0 0.0
    %192 = vmatpush1.msra.mxu0 0.0
    %193 = vmatprep.subr.mxu0 0.0
    %194 = vmatpush1.msra.mxu0 0.0
    %195 = vmatprep.subr.mxu0 0.0
    %196 = vmatpush1.msra.mxu0 0.0
    %197 = vmatprep.subr.mxu0 0.0
    %198 = vmatpush1.msra.mxu0 0.0
    %199 = vmatprep.subr.mxu0 0.0
    %200 = vmatpush1.msra.mxu0 0.0
    %201 = vmatprep.subr.mxu0 0.0
    %202 = vmatpush1.msra.mxu0 0.0
    %203 = vmatprep.subr.mxu0 0.0
    %204 = vmatpush1.msra.mxu0 0.0
    %205 = vmatprep.subr.mxu0 0.0
    %206 = vmatpush1.msra.mxu0 0.0
    %207 = vmatprep.subr.mxu0 0.0
    %208 = vmatpush1.msra.mxu0 0.0
    %209 = vmatprep.subr.mxu0 0.0
    %210 = vmatpush1.msra.mxu0 0.0
    %211 = vmatprep.subr.mxu0 0.0
    %212 = vmatpush1.msra.mxu0 0.0
    %213 = vmatprep.subr.mxu0 0.0
    %214 = vmatpush1.msra.mxu0 0.0
    %215 = vmatprep.subr.mxu0 0.0
    %216 = vmatpush1.msra.mxu0 0.0
    %217 = vmatprep.subr.mxu0 0.0
    %218 = vmatpush1.msra.mxu0 0.0
    %219 = vmatprep.subr.mxu0 0.0
    %220 = vmatpush1.msra.mxu0 0.0
    %221 = vmatprep.subr.mxu0 0.0
    %222 = vmatpush1.msra.mxu0 0.0
    %223 = vmatprep.subr.mxu0 0.0
    %224 = vmatpush1.msra.mxu0 0.0
    %225 = vmatprep.subr.mxu0 0.0
    %226 = vmatpush1.msra.mxu0 0.0
    %227 = vmatprep.subr.mxu0 0.0
    %228 = vmatpush1.msra.mxu0 0.0
    %229 = vmatprep.subr.mxu0 0.0
    %230 = vmatpush1.msra.mxu0 0.0
    %231 = vmatprep.subr.mxu0 0.0
    %232 = vmatpush1.msra.mxu0 0.0
    %233 = vmatprep.subr.mxu0 0.0
    %234 = vmatpush1.msra.mxu0 0.0
    %235 = vmatprep.mubr.f32.mxu0 0.0
    %236 = vmatmul.mubr.f32.gmra.mrb[0].mxu0 %v169
    %v237 = vpop.f32.mrb[0].mxu0
    %v238 = vadd.f32 0.0, %v237
    %v239 = vpop.f32.mrb[0].mxu0
    %240 = vdwg.mxu0
    %v241 = vadd.f32 %v166, %v238
    %v242 = vxor.u32 %v241, 2147483648
    %v243 = vmul.f32 %v242, 1.442695
    %v244 = vpow.pop %v243
    %v245 = vadd.f32 %v244, 1.0
    %v246 = vrcp.pop %v245
    %v247 = vmul.f32 1.0, %v246
    %v248 = vtanh.pop %v241
    %v249 = vmul.f32 %v247, 0.0
    %251 = vrot.lane.b32.xlu0 %v248, 64
    %v252 = vpop.permute.xlu0 %251
    %v254 = vmul.f32 %v247, %v252
    %256 = vrot.lane.b32.xlu0 %v254, 32
    %v257 = vpop.permute.xlu0 %256
    %v259 = vadd.f32 %v249, %v257
    %v260 = vtanh.pop %v259
    %262 = vrot.lane.b32.xlu0 %v260, 64
    %v263 = vpop.permute.xlu0 %262
    %v265 = vmul.f32 %v247, %v263
    %267 = vrot.lane.b32.xlu0 %v265, 32
    %v268 = vpop.permute.xlu0 %267
    %vm270 = vcmask 257024
    %271 = vst.msk [vmem:[#allocation2] sm:$0xf] %vm270, %v268
    %s272 = scalar_lea.vmem [#allocation3], 4
    %v273 = vld [vmem:[%s272] sm:$0xf]
    %v274 = vsel %vm167, %v268, 0
    %276 = vmatprep.subr.mxu0 0.0
    %277 = vmatpush1.msra.mxu0 %v162
    %278 = vmatprep.subr.mxu0 0.0
    %279 = vmatpush1.msra.mxu0 %v163
    %280 = vmatprep.subr.mxu0 0.0
    %281 = vmatpush1.msra.mxu0 %v164
    %282 = vmatprep.subr.mxu0 0.0
    %283 = vmatpush1.msra.mxu0 %v165
    %284 = vmatprep.subr.mxu0 0.0
    %285 = vmatpush1.msra.mxu0 0.0
    %286 = vmatprep.subr.mxu0 0.0
    %287 = vmatpush1.msra.mxu0 0.0
    %288 = vmatprep.subr.mxu0 0.0
    %289 = vmatpush1.msra.mxu0 0.0
    %290 = vmatprep.subr.mxu0 0.0
    %291 = vmatpush1.msra.mxu0 0.0
    %292 = vmatprep.subr.mxu0 0.0
    %293 = vmatpush1.msra.mxu0 0.0
    %294 = vmatprep.subr.mxu0 0.0
    %295 = vmatpush1.msra.mxu0 0.0
    %296 = vmatprep.subr.mxu0 0.0
    %297 = vmatpush1.msra.mxu0 0.0
    %298 = vmatprep.subr.mxu0 0.0
    %299 = vmatpush1.msra.mxu0 0.0
    %300 = vmatprep.subr.mxu0 0.0
    %301 = vmatpush1.msra.mxu0 0.0
    %302 = vmatprep.subr.mxu0 0.0
    %303 = vmatpush1.msra.mxu0 0.0
    %304 = vmatprep.subr.mxu0 0.0
    %305 = vmatpush1.msra.mxu0 0.0
    %306 = vmatprep.subr.mxu0 0.0
    %307 = vmatpush1.msra.mxu0 0.0
    %308 = vmatprep.subr.mxu0 0.0
    %309 = vmatpush1.msra.mxu0 0.0
    %310 = vmatprep.subr.mxu0 0.0
    %311 = vmatpush1.msra.mxu0 0.0
    %312 = vmatprep.subr.mxu0 0.0
    %313 = vmatpush1.msra.mxu0 0.0
    %314 = vmatprep.subr.mxu0 0.0
    %315 = vmatpush1.msra.mxu0 0.0
    %316 = vmatprep.subr.mxu0 0.0
    %317 = vmatpush1.msra.mxu0 0.0
    %318 = vmatprep.subr.mxu0 0.0
    %319 = vmatpush1.msra.mxu0 0.0
    %320 = vmatprep.subr.mxu0 0.0
    %321 = vmatpush1.msra.mxu0 0.0
    %322 = vmatprep.subr.mxu0 0.0
    %323 = vmatpush1.msra.mxu0 0.0
    %324 = vmatprep.subr.mxu0 0.0
    %325 = vmatpush1.msra.mxu0 0.0
    %326 = vmatprep.subr.mxu0 0.0
    %327 = vmatpush1.msra.mxu0 0.0
    %328 = vmatprep.subr.mxu0 0.0
    %329 = vmatpush1.msra.mxu0 0.0
    %330 = vmatprep.subr.mxu0 0.0
    %331 = vmatpush1.msra.mxu0 0.0
    %332 = vmatprep.subr.mxu0 0.0
    %333 = vmatpush1.msra.mxu0 0.0
    %334 = vmatprep.subr.mxu0 0.0
    %335 = vmatpush1.msra.mxu0 0.0
    %336 = vmatprep.subr.mxu0 0.0
    %337 = vmatpush1.msra.mxu0 0.0
    %338 = vmatprep.subr.mxu0 0.0
    %339 = vmatpush1.msra.mxu0 0.0
    %340 = vmatprep.mubr.f32.mxu0 0.0
    %341 = vmatmul.mubr.f32.gmra.mrb[0].mxu0 %v274
    %v342 = vpop.f32.mrb[0].mxu0
    %v343 = vadd.f32 0.0, %v342
    %v344 = vpop.f32.mrb[0].mxu0
    %345 = vdwg.mxu0
    %v346 = vadd.f32 %v273, %v343
    %v347 = vxor.u32 %v346, 2147483648
    %v348 = vmul.f32 %v347, 1.442695
    %v349 = vpow.pop %v348
    %v350 = vadd.f32 %v349, 1.0
    %v351 = vrcp.pop %v350
    %v352 = vmul.f32 1.0, %v351
    %v353 = vtanh.pop %v346
    %v354 = vmul.f32 %v352, %v259
    %356 = vrot.lane.b32.xlu0 %v353, 64
    %v357 = vpop.permute.xlu0 %356
    %v359 = vmul.f32 %v352, %v357
    %361 = vrot.lane.b32.xlu0 %v359, 32
    %v362 = vpop.permute.xlu0 %361
    %v364 = vadd.f32 %v354, %v362
    %v365 = vtanh.pop %v364
    %367 = vrot.lane.b32.xlu0 %v365, 64
    %v368 = vpop.permute.xlu0 %367
    %v370 = vmul.f32 %v352, %v368
    %372 = vrot.lane.b32.xlu0 %v370, 32
    %v373 = vpop.permute.xlu0 %372
    %s375 = scalar_lea.vmem [#allocation2], 4
    %376 = vst.msk [vmem:[%s375] sm:$0xf] %vm270, %v373
    %s377 = scalar_lea.vmem [#allocation3], 8
    %v378 = vld [vmem:[%s377] sm:$0xf]
    %v379 = vsel %vm167, %v373, 0
    %381 = vmatprep.subr.mxu0 0.0
    %382 = vmatpush1.msra.mxu0 %v162
    %383 = vmatprep.subr.mxu0 0.0
    %384 = vmatpush1.msra.mxu0 %v163
    %385 = vmatprep.subr.mxu0 0.0
    %386 = vmatpush1.msra.mxu0 %v164
    %387 = vmatprep.subr.mxu0 0.0
    %388 = vmatpush1.msra.mxu0 %v165
    %389 = vmatprep.subr.mxu0 0.0
    %390 = vmatpush1.msra.mxu0 0.0
    %391 = vmatprep.subr.mxu0 0.0
    %392 = vmatpush1.msra.mxu0 0.0
    %393 = vmatprep.subr.mxu0 0.0
    %394 = vmatpush1.msra.mxu0 0.0
    %395 = vmatprep.subr.mxu0 0.0
    %396 = vmatpush1.msra.mxu0 0.0
    %397 = vmatprep.subr.mxu0 0.0
    %398 = vmatpush1.msra.mxu0 0.0
    %399 = vmatprep.subr.mxu0 0.0
    %400 = vmatpush1.msra.mxu0 0.0
    %401 = vmatprep.subr.mxu0 0.0
    %402 = vmatpush1.msra.mxu0 0.0
    %403 = vmatprep.subr.mxu0 0.0
    %404 = vmatpush1.msra.mxu0 0.0
    %405 = vmatprep.subr.mxu0 0.0
    %406 = vmatpush1.msra.mxu0 0.0
    %407 = vmatprep.subr.mxu0 0.0
    %408 = vmatpush1.msra.mxu0 0.0
    %409 = vmatprep.subr.mxu0 0.0
    %410 = vmatpush1.msra.mxu0 0.0
    %411 = vmatprep.subr.mxu0 0.0
    %412 = vmatpush1.msra.mxu0 0.0
    %413 = vmatprep.subr.mxu0 0.0
    %414 = vmatpush1.msra.mxu0 0.0
    %415 = vmatprep.subr.mxu0 0.0
    %416 = vmatpush1.msra.mxu0 0.0
    %417 = vmatprep.subr.mxu0 0.0
    %418 = vmatpush1.msra.mxu0 0.0
    %419 = vmatprep.subr.mxu0 0.0
    %420 = vmatpush1.msra.mxu0 0.0
    %421 = vmatprep.subr.mxu0 0.0
    %422 = vmatpush1.msra.mxu0 0.0
    %423 = vmatprep.subr.mxu0 0.0
    %424 = vmatpush1.msra.mxu0 0.0
    %425 = vmatprep.subr.mxu0 0.0
    %426 = vmatpush1.msra.mxu0 0.0
    %427 = vmatprep.subr.mxu0 0.0
    %428 = vmatpush1.msra.mxu0 0.0
    %429 = vmatprep.subr.mxu0 0.0
    %430 = vmatpush1.msra.mxu0 0.0
    %431 = vmatprep.subr.mxu0 0.0
    %432 = vmatpush1.msra.mxu0 0.0
    %433 = vmatprep.subr.mxu0 0.0
    %434 = vmatpush1.msra.mxu0 0.0
    %435 = vmatprep.subr.mxu0 0.0
    %436 = vmatpush1.msra.mxu0 0.0
    %437 = vmatprep.subr.mxu0 0.0
    %438 = vmatpush1.msra.mxu0 0.0
    %439 = vmatprep.subr.mxu0 0.0
    %440 = vmatpush1.msra.mxu0 0.0
    %441 = vmatprep.subr.mxu0 0.0
    %442 = vmatpush1.msra.mxu0 0.0
    %443 = vmatprep.subr.mxu0 0.0
    %444 = vmatpush1.msra.mxu0 0.0
    %445 = vmatprep.mubr.f32.mxu0 0.0
    %446 = vmatmul.mubr.f32.gmra.mrb[0].mxu0 %v379
    %v447 = vpop.f32.mrb[0].mxu0
    %v448 = vadd.f32 0.0, %v447
    %v449 = vpop.f32.mrb[0].mxu0
    %450 = vdwg.mxu0
    %v451 = vadd.f32 %v378, %v448
    %v452 = vxor.u32 %v451, 2147483648
    %v453 = vmul.f32 %v452, 1.442695
    %v454 = vpow.pop %v453
    %v455 = vadd.f32 %v454, 1.0
    %v456 = vrcp.pop %v455
    %v457 = vmul.f32 1.0, %v456
    %v458 = vtanh.pop %v451
    %v459 = vmul.f32 %v457, %v364
    %461 = vrot.lane.b32.xlu0 %v458, 64
    %v462 = vpop.permute.xlu0 %461
    %v464 = vmul.f32 %v457, %v462
    %466 = vrot.lane.b32.xlu0 %v464, 32
    %v467 = vpop.permute.xlu0 %466
    %v469 = vadd.f32 %v459, %v467
    %v470 = vtanh.pop %v469
    %472 = vrot.lane.b32.xlu0 %v470, 64
    %v473 = vpop.permute.xlu0 %472
    %v475 = vmul.f32 %v457, %v473
    %477 = vrot.lane.b32.xlu0 %v475, 32
    %v478 = vpop.permute.xlu0 %477
    %s480 = scalar_lea.vmem [#allocation2], 8
    %481 = vst.msk [vmem:[%s480] sm:$0xf] %vm270, %v478
    %s482 = scalar_lea.vmem [#allocation3], 12
    %v483 = vld [vmem:[%s482] sm:$0xf]
    %v484 = vsel %vm167, %v478, 0
    %486 = vmatprep.subr.mxu0 0.0
    %487 = vmatpush1.msra.mxu0 %v162
    %488 = vmatprep.subr.mxu0 0.0
    %489 = vmatpush1.msra.mxu0 %v163
    %490 = vmatprep.subr.mxu0 0.0
    %491 = vmatpush1.msra.mxu0 %v164
    %492 = vmatprep.subr.mxu0 0.0
    %493 = vmatpush1.msra.mxu0 %v165
    %494 = vmatprep.subr.mxu0 0.0
    %495 = vmatpush1.msra.mxu0 0.0
    %496 = vmatprep.subr.mxu0 0.0
    %497 = vmatpush1.msra.mxu0 0.0
    %498 = vmatprep.subr.mxu0 0.0
    %499 = vmatpush1.msra.mxu0 0.0
    %500 = vmatprep.subr.mxu0 0.0
    %501 = vmatpush1.msra.mxu0 0.0
    %502 = vmatprep.subr.mxu0 0.0
    %503 = vmatpush1.msra.mxu0 0.0
    %504 = vmatprep.subr.mxu0 0.0
    %505 = vmatpush1.msra.mxu0 0.0
    %506 = vmatprep.subr.mxu0 0.0
    %507 = vmatpush1.msra.mxu0 0.0
    %508 = vmatprep.subr.mxu0 0.0
    %509 = vmatpush1.msra.mxu0 0.0
    %510 = vmatprep.subr.mxu0 0.0
    %511 = vmatpush1.msra.mxu0 0.0
    %512 = vmatprep.subr.mxu0 0.0
    %513 = vmatpush1.msra.mxu0 0.0
    %514 = vmatprep.subr.mxu0 0.0
    %515 = vmatpush1.msra.mxu0 0.0
    %516 = vmatprep.subr.mxu0 0.0
    %517 = vmatpush1.msra.mxu0 0.0
    %518 = vmatprep.subr.mxu0 0.0
    %519 = vmatpush1.msra.mxu0 0.0
    %520 = vmatprep.subr.mxu0 0.0
    %521 = vmatpush1.msra.mxu0 0.0
    %522 = vmatprep.subr.mxu0 0.0
    %523 = vmatpush1.msra.mxu0 0.0
    %524 = vmatprep.subr.mxu0 0.0
    %525 = vmatpush1.msra.mxu0 0.0
    %526 = vmatprep.subr.mxu0 0.0
    %527 = vmatpush1.msra.mxu0 0.0
    %528 = vmatprep.subr.mxu0 0.0
    %529 = vmatpush1.msra.mxu0 0.0
    %530 = vmatprep.subr.mxu0 0.0
    %531 = vmatpush1.msra.mxu0 0.0
    %532 = vmatprep.subr.mxu0 0.0
    %533 = vmatpush1.msra.mxu0 0.0
    %534 = vmatprep.subr.mxu0 0.0
    %535 = vmatpush1.msra.mxu0 0.0
    %536 = vmatprep.subr.mxu0 0.0
    %537 = vmatpush1.msra.mxu0 0.0
    %538 = vmatprep.subr.mxu0 0.0
    %539 = vmatpush1.msra.mxu0 0.0
    %540 = vmatprep.subr.mxu0 0.0
    %541 = vmatpush1.msra.mxu0 0.0
    %542 = vmatprep.subr.mxu0 0.0
    %543 = vmatpush1.msra.mxu0 0.0
    %544 = vmatprep.subr.mxu0 0.0
    %545 = vmatpush1.msra.mxu0 0.0
    %546 = vmatprep.subr.mxu0 0.0
    %547 = vmatpush1.msra.mxu0 0.0
    %548 = vmatprep.subr.mxu0 0.0
    %549 = vmatpush1.msra.mxu0 0.0
    %550 = vmatprep.mubr.f32.mxu0 0.0
    %551 = vmatmul.mubr.f32.gmra.mrb[0].mxu0 %v484
    %v552 = vpop.f32.mrb[0].mxu0
    %v553 = vadd.f32 0.0, %v552
    %v554 = vpop.f32.mrb[0].mxu0
    %555 = vdwg.mxu0
    %v556 = vadd.f32 %v483, %v553
    %v557 = vxor.u32 %v556, 2147483648
    %v558 = vmul.f32 %v557, 1.442695
    %v559 = vpow.pop %v558
    %v560 = vadd.f32 %v559, 1.0
    %v561 = vrcp.pop %v560
    %v562 = vmul.f32 1.0, %v561
    %v563 = vtanh.pop %v556
    %v564 = vmul.f32 %v562, %v469
    %566 = vrot.lane.b32.xlu0 %v563, 64
    %v567 = vpop.permute.xlu0 %566
    %v569 = vmul.f32 %v562, %v567
    %571 = vrot.lane.b32.xlu0 %v569, 32
    %v572 = vpop.permute.xlu0 %571
    %v574 = vadd.f32 %v564, %v572
    %v575 = vtanh.pop %v574
    %577 = vrot.lane.b32.xlu0 %v575, 64
    %v578 = vpop.permute.xlu0 %577
    %v580 = vmul.f32 %v562, %v578
    %582 = vrot.lane.b32.xlu0 %v580, 32
    %v583 = vpop.permute.xlu0 %582
    %s585 = scalar_lea.vmem [#allocation2], 12
    %586 = vst.msk [vmem:[%s585] sm:$0xf] %vm270, %v583
    %s587 = scalar_lea.vmem [#allocation3], 16
    %v588 = vld [vmem:[%s587] sm:$0xf]
    %v589 = vsel %vm167, %v583, 0
    %591 = vmatprep.subr.mxu0 0.0
    %592 = vmatpush1.msra.mxu0 %v162
    %593 = vmatprep.subr.mxu0 0.0
    %594 = vmatpush1.msra.mxu0 %v163
    %595 = vmatprep.subr.mxu0 0.0
    %596 = vmatpush1.msra.mxu0 %v164
    %597 = vmatprep.subr.mxu0 0.0
    %598 = vmatpush1.msra.mxu0 %v165
    %599 = vmatprep.subr.mxu0 0.0
    %600 = vmatpush1.msra.mxu0 0.0
    %601 = vmatprep.subr.mxu0 0.0
    %602 = vmatpush1.msra.mxu0 0.0
    %603 = vmatprep.subr.mxu0 0.0
    %604 = vmatpush1.msra.mxu0 0.0
    %605 = vmatprep.subr.mxu0 0.0
    %606 = vmatpush1.msra.mxu0 0.0
    %607 = vmatprep.subr.mxu0 0.0
    %608 = vmatpush1.msra.mxu0 0.0
    %609 = vmatprep.subr.mxu0 0.0
    %610 = vmatpush1.msra.mxu0 0.0
    %611 = vmatprep.subr.mxu0 0.0
    %612 = vmatpush1.msra.mxu0 0.0
    %613 = vmatprep.subr.mxu0 0.0
    %614 = vmatpush1.msra.mxu0 0.0
    %615 = vmatprep.subr.mxu0 0.0
    %616 = vmatpush1.msra.mxu0 0.0
    %617 = vmatprep.subr.mxu0 0.0
    %618 = vmatpush1.msra.mxu0 0.0
    %619 = vmatprep.subr.mxu0 0.0
    %620 = vmatpush1.msra.mxu0 0.0
    %621 = vmatprep.subr.mxu0 0.0
    %622 = vmatpush1.msra.mxu0 0.0
    %623 = vmatprep.subr.mxu0 0.0
    %624 = vmatpush1.msra.mxu0 0.0
    %625 = vmatprep.subr.mxu0 0.0
    %626 = vmatpush1.msra.mxu0 0.0
    %627 = vmatprep.subr.mxu0 0.0
    %628 = vmatpush1.msra.mxu0 0.0
    %629 = vmatprep.subr.mxu0 0.0
    %630 = vmatpush1.msra.mxu0 0.0
    %631 = vmatprep.subr.mxu0 0.0
    %632 = vmatpush1.msra.mxu0 0.0
    %633 = vmatprep.subr.mxu0 0.0
    %634 = vmatpush1.msra.mxu0 0.0
    %635 = vmatprep.subr.mxu0 0.0
    %636 = vmatpush1.msra.mxu0 0.0
    %637 = vmatprep.subr.mxu0 0.0
    %638 = vmatpush1.msra.mxu0 0.0
    %639 = vmatprep.subr.mxu0 0.0
    %640 = vmatpush1.msra.mxu0 0.0
    %641 = vmatprep.subr.mxu0 0.0
    %642 = vmatpush1.msra.mxu0 0.0
    %643 = vmatprep.subr.mxu0 0.0
    %644 = vmatpush1.msra.mxu0 0.0
    %645 = vmatprep.subr.mxu0 0.0
    %646 = vmatpush1.msra.mxu0 0.0
    %647 = vmatprep.subr.mxu0 0.0
    %648 = vmatpush1.msra.mxu0 0.0
    %649 = vmatprep.subr.mxu0 0.0
    %650 = vmatpush1.msra.mxu0 0.0
    %651 = vmatprep.subr.mxu0 0.0
    %652 = vmatpush1.msra.mxu0 0.0
    %653 = vmatprep.subr.mxu0 0.0
    %654 = vmatpush1.msra.mxu0 0.0
    %655 = vmatprep.mubr.f32.mxu0 0.0
    %656 = vmatmul.mubr.f32.gmra.mrb[0].mxu0 %v589
    %v657 = vpop.f32.mrb[0].mxu0
    %v658 = vadd.f32 0.0, %v657
    %v659 = vpop.f32.mrb[0].mxu0
    %660 = vdwg.mxu0
    %v661 = vadd.f32 %v588, %v658
    %v662 = vxor.u32 %v661, 2147483648
    %v663 = vmul.f32 %v662, 1.442695
    %v664 = vpow.pop %v663
    %v665 = vadd.f32 %v664, 1.0
    %v666 = vrcp.pop %v665
    %v667 = vmul.f32 1.0, %v666
    %v668 = vtanh.pop %v661
    %v669 = vmul.f32 %v667, %v574
    %671 = vrot.lane.b32.xlu0 %v668, 64
    %v672 = vpop.permute.xlu0 %671
    %v674 = vmul.f32 %v667, %v672
    %676 = vrot.lane.b32.xlu0 %v674, 32
    %v677 = vpop.permute.xlu0 %676
    %v679 = vadd.f32 %v669, %v677
    %v680 = vtanh.pop %v679
    %682 = vrot.lane.b32.xlu0 %v680, 64
    %v683 = vpop.permute.xlu0 %682
    %v685 = vmul.f32 %v667, %v683
    %687 = vrot.lane.b32.xlu0 %v685, 32
    %v688 = vpop.permute.xlu0 %687
    %s690 = scalar_lea.vmem [#allocation2], 16
    %691 = vst.msk [vmem:[%s690] sm:$0xf] %vm270, %v688
    %s692 = scalar_lea.vmem [#allocation3], 20
    %v693 = vld [vmem:[%s692] sm:$0xf]
    %v694 = vsel %vm167, %v688, 0
    %696 = vmatprep.subr.mxu0 0.0
    %697 = vmatpush1.msra.mxu0 %v162
    %698 = vmatprep.subr.mxu0 0.0
    %699 = vmatpush1.msra.mxu0 %v163
    %700 = vmatprep.subr.mxu0 0.0
    %701 = vmatpush1.msra.mxu0 %v164
    %702 = vmatprep.subr.mxu0 0.0
    %703 = vmatpush1.msra.mxu0 %v165
    %704 = vmatprep.subr.mxu0 0.0
    %705 = vmatpush1.msra.mxu0 0.0
    %706 = vmatprep.subr.mxu0 0.0
    %707 = vmatpush1.msra.mxu0 0.0
    %708 = vmatprep.subr.mxu0 0.0
    %709 = vmatpush1.msra.mxu0 0.0
    %710 = vmatprep.subr.mxu0 0.0
    %711 = vmatpush1.msra.mxu0 0.0
    %712 = vmatprep.subr.mxu0 0.0
    %713 = vmatpush1.msra.mxu0 0.0
    %714 = vmatprep.subr.mxu0 0.0
    %715 = vmatpush1.msra.mxu0 0.0
    %716 = vmatprep.subr.mxu0 0.0
    %717 = vmatpush1.msra.mxu0 0.0
    %718 = vmatprep.subr.mxu0 0.0
    %719 = vmatpush1.msra.mxu0 0.0
    %720 = vmatprep.subr.mxu0 0.0
    %721 = vmatpush1.msra.mxu0 0.0
    %722 = vmatprep.subr.mxu0 0.0
    %723 = vmatpush1.msra.mxu0 0.0
    %724 = vmatprep.subr.mxu0 0.0
    %725 = vmatpush1.msra.mxu0 0.0
    %726 = vmatprep.subr.mxu0 0.0
    %727 = vmatpush1.msra.mxu0 0.0
    %728 = vmatprep.subr.mxu0 0.0
    %729 = vmatpush1.msra.mxu0 0.0
    %730 = vmatprep.subr.mxu0 0.0
    %731 = vmatpush1.msra.mxu0 0.0
    %732 = vmatprep.subr.mxu0 0.0
    %733 = vmatpush1.msra.mxu0 0.0
    %734 = vmatprep.subr.mxu0 0.0
    %735 = vmatpush1.msra.mxu0 0.0
    %736 = vmatprep.subr.mxu0 0.0
    %737 = vmatpush1.msra.mxu0 0.0
    %738 = vmatprep.subr.mxu0 0.0
    %739 = vmatpush1.msra.mxu0 0.0
    %740 = vmatprep.subr.mxu0 0.0
    %741 = vmatpush1.msra.mxu0 0.0
    %742 = vmatprep.subr.mxu0 0.0
    %743 = vmatpush1.msra.mxu0 0.0
    %744 = vmatprep.subr.mxu0 0.0
    %745 = vmatpush1.msra.mxu0 0.0
    %746 = vmatprep.subr.mxu0 0.0
    %747 = vmatpush1.msra.mxu0 0.0
    %748 = vmatprep.subr.mxu0 0.0
    %749 = vmatpush1.msra.mxu0 0.0
    %750 = vmatprep.subr.mxu0 0.0
    %751 = vmatpush1.msra.mxu0 0.0
    %752 = vmatprep.subr.mxu0 0.0
    %753 = vmatpush1.msra.mxu0 0.0
    %754 = vmatprep.subr.mxu0 0.0
    %755 = vmatpush1.msra.mxu0 0.0
    %756 = vmatprep.subr.mxu0 0.0
    %757 = vmatpush1.msra.mxu0 0.0
    %758 = vmatprep.subr.mxu0 0.0
    %759 = vmatpush1.msra.mxu0 0.0
    %760 = vmatprep.mubr.f32.mxu0 0.0
    %761 = vmatmul.mubr.f32.gmra.mrb[0].mxu0 %v694
    %v762 = vpop.f32.mrb[0].mxu0
    %v763 = vadd.f32 0.0, %v762
    %v764 = vpop.f32.mrb[0].mxu0
    %765 = vdwg.mxu0
    %v766 = vadd.f32 %v693, %v763
    %v767 = vxor.u32 %v766, 2147483648
    %v768 = vmul.f32 %v767, 1.442695
    %v769 = vpow.pop %v768
    %v770 = vadd.f32 %v769, 1.0
    %v771 = vrcp.pop %v770
    %v772 = vmul.f32 1.0, %v771
    %v773 = vtanh.pop %v766
    %v774 = vmul.f32 %v772, %v679
    %776 = vrot.lane.b32.xlu0 %v773, 64
    %v777 = vpop.permute.xlu0 %776
    %v779 = vmul.f32 %v772, %v777
    %781 = vrot.lane.b32.xlu0 %v779, 32
    %v782 = vpop.permute.xlu0 %781
    %v784 = vadd.f32 %v774, %v782
    %v785 = vtanh.pop %v784
    %787 = vrot.lane.b32.xlu0 %v785, 64
    %v788 = vpop.permute.xlu0 %787
    %v790 = vmul.f32 %v772, %v788
    %792 = vrot.lane.b32.xlu0 %v790, 32
    %v793 = vpop.permute.xlu0 %792
    %s795 = scalar_lea.vmem [#allocation2], 20
    %796 = vst.msk [vmem:[%s795] sm:$0xf] %vm270, %v793
    %s797 = scalar_lea.vmem [#allocation3], 24
    %v798 = vld [vmem:[%s797] sm:$0xf]
    %v799 = vsel %vm167, %v793, 0
    %801 = vmatprep.subr.mxu0 0.0
    %802 = vmatpush1.msra.mxu0 %v162
    %803 = vmatprep.subr.mxu0 0.0
    %804 = vmatpush1.msra.mxu0 %v163
    %805 = vmatprep.subr.mxu0 0.0
    %806 = vmatpush1.msra.mxu0 %v164
    %807 = vmatprep.subr.mxu0 0.0
    %808 = vmatpush1.msra.mxu0 %v165
    %809 = vmatprep.subr.mxu0 0.0
    %810 = vmatpush1.msra.mxu0 0.0
    %811 = vmatprep.subr.mxu0 0.0
    %812 = vmatpush1.msra.mxu0 0.0
    %813 = vmatprep.subr.mxu0 0.0
    %814 = vmatpush1.msra.mxu0 0.0
    %815 = vmatprep.subr.mxu0 0.0
    %816 = vmatpush1.msra.mxu0 0.0
    %817 = vmatprep.subr.mxu0 0.0
    %818 = vmatpush1.msra.mxu0 0.0
    %819 = vmatprep.subr.mxu0 0.0
    %820 = vmatpush1.msra.mxu0 0.0
    %821 = vmatprep.subr.mxu0 0.0
    %822 = vmatpush1.msra.mxu0 0.0
    %823 = vmatprep.subr.mxu0 0.0
    %824 = vmatpush1.msra.mxu0 0.0
    %825 = vmatprep.subr.mxu0 0.0
    %826 = vmatpush1.msra.mxu0 0.0
    %827 = vmatprep.subr.mxu0 0.0
    %828 = vmatpush1.msra.mxu0 0.0
    %829 = vmatprep.subr.mxu0 0.0
    %830 = vmatpush1.msra.mxu0 0.0
    %831 = vmatprep.subr.mxu0 0.0
    %832 = vmatpush1.msra.mxu0 0.0
    %833 = vmatprep.subr.mxu0 0.0
    %834 = vmatpush1.msra.mxu0 0.0
    %835 = vmatprep.subr.mxu0 0.0
    %836 = vmatpush1.msra.mxu0 0.0
    %837 = vmatprep.subr.mxu0 0.0
    %838 = vmatpush1.msra.mxu0 0.0
    %839 = vmatprep.subr.mxu0 0.0
    %840 = vmatpush1.msra.mxu0 0.0
    %841 = vmatprep.subr.mxu0 0.0
    %842 = vmatpush1.msra.mxu0 0.0
    %843 = vmatprep.subr.mxu0 0.0
    %844 = vmatpush1.msra.mxu0 0.0
    %845 = vmatprep.subr.mxu0 0.0
    %846 = vmatpush1.msra.mxu0 0.0
    %847 = vmatprep.subr.mxu0 0.0
    %848 = vmatpush1.msra.mxu0 0.0
    %849 = vmatprep.subr.mxu0 0.0
    %850 = vmatpush1.msra.mxu0 0.0
    %851 = vmatprep.subr.mxu0 0.0
    %852 = vmatpush1.msra.mxu0 0.0
    %853 = vmatprep.subr.mxu0 0.0
    %854 = vmatpush1.msra.mxu0 0.0
    %855 = vmatprep.subr.mxu0 0.0
    %856 = vmatpush1.msra.mxu0 0.0
    %857 = vmatprep.subr.mxu0 0.0
    %858 = vmatpush1.msra.mxu0 0.0
    %859 = vmatprep.subr.mxu0 0.0
    %860 = vmatpush1.msra.mxu0 0.0
    %861 = vmatprep.subr.mxu0 0.0
    %862 = vmatpush1.msra.mxu0 0.0
    %863 = vmatprep.subr.mxu0 0.0
    %864 = vmatpush1.msra.mxu0 0.0
    %865 = vmatprep.mubr.f32.mxu0 0.0
    %866 = vmatmul.mubr.f32.gmra.mrb[0].mxu0 %v799
    %v867 = vpop.f32.mrb[0].mxu0
    %v868 = vadd.f32 0.0, %v867
    %v869 = vpop.f32.mrb[0].mxu0
    %870 = vdwg.mxu0
    %v871 = vadd.f32 %v798, %v868
    %v872 = vxor.u32 %v871, 2147483648
    %v873 = vmul.f32 %v872, 1.442695
    %v874 = vpow.pop %v873
    %v875 = vadd.f32 %v874, 1.0
    %v876 = vrcp.pop %v875
    %v877 = vmul.f32 1.0, %v876
    %v878 = vtanh.pop %v871
    %v879 = vmul.f32 %v877, %v784
    %881 = vrot.lane.b32.xlu0 %v878, 64
    %v882 = vpop.permute.xlu0 %881
    %v884 = vmul.f32 %v877, %v882
    %886 = vrot.lane.b32.xlu0 %v884, 32
    %v887 = vpop.permute.xlu0 %886
    %v889 = vadd.f32 %v879, %v887
    %v890 = vtanh.pop %v889
    %892 = vrot.lane.b32.xlu0 %v890, 64
    %v893 = vpop.permute.xlu0 %892
    %v895 = vmul.f32 %v877, %v893
    %897 = vrot.lane.b32.xlu0 %v895, 32
    %v898 = vpop.permute.xlu0 %897
    %s900 = scalar_lea.vmem [#allocation2], 24
    %901 = vst.msk [vmem:[%s900] sm:$0xf] %vm270, %v898
    %s902 = scalar_lea.vmem [#allocation3], 28
    %v903 = vld [vmem:[%s902] sm:$0xf]
    %v904 = vsel %vm167, %v898, 0
    %906 = vmatprep.subr.mxu0 0.0
    %907 = vmatpush1.msra.mxu0 %v162
    %908 = vmatprep.subr.mxu0 0.0
    %909 = vmatpush1.msra.mxu0 %v163
    %910 = vmatprep.subr.mxu0 0.0
    %911 = vmatpush1.msra.mxu0 %v164
    %912 = vmatprep.subr.mxu0 0.0
    %913 = vmatpush1.msra.mxu0 %v165
    %914 = vmatprep.subr.mxu0 0.0
    %915 = vmatpush1.msra.mxu0 0.0
    %916 = vmatprep.subr.mxu0 0.0
    %917 = vmatpush1.msra.mxu0 0.0
    %918 = vmatprep.subr.mxu0 0.0
    %919 = vmatpush1.msra.mxu0 0.0
    %920 = vmatprep.subr.mxu0 0.0
    %921 = vmatpush1.msra.mxu0 0.0
    %922 = vmatprep.subr.mxu0 0.0
    %923 = vmatpush1.msra.mxu0 0.0
    %924 = vmatprep.subr.mxu0 0.0
    %925 = vmatpush1.msra.mxu0 0.0
    %926 = vmatprep.subr.mxu0 0.0
    %927 = vmatpush1.msra.mxu0 0.0
    %928 = vmatprep.subr.mxu0 0.0
    %929 = vmatpush1.msra.mxu0 0.0
    %930 = vmatprep.subr.mxu0 0.0
    %931 = vmatpush1.msra.mxu0 0.0
    %932 = vmatprep.subr.mxu0 0.0
    %933 = vmatpush1.msra.mxu0 0.0
    %934 = vmatprep.subr.mxu0 0.0
    %935 = vmatpush1.msra.mxu0 0.0
    %936 = vmatprep.subr.mxu0 0.0
    %937 = vmatpush1.msra.mxu0 0.0
    %938 = vmatprep.subr.mxu0 0.0
    %939 = vmatpush1.msra.mxu0 0.0
    %940 = vmatprep.subr.mxu0 0.0
    %941 = vmatpush1.msra.mxu0 0.0
    %942 = vmatprep.subr.mxu0 0.0
    %943 = vmatpush1.msra.mxu0 0.0
    %944 = vmatprep.subr.mxu0 0.0
    %945 = vmatpush1.msra.mxu0 0.0
    %946 = vmatprep.subr.mxu0 0.0
    %947 = vmatpush1.msra.mxu0 0.0
    %948 = vmatprep.subr.mxu0 0.0
    %949 = vmatpush1.msra.mxu0 0.0
    %950 = vmatprep.subr.mxu0 0.0
    %951 = vmatpush1.msra.mxu0 0.0
    %952 = vmatprep.subr.mxu0 0.0
    %953 = vmatpush1.msra.mxu0 0.0
    %954 = vmatprep.subr.mxu0 0.0
    %955 = vmatpush1.msra.mxu0 0.0
    %956 = vmatprep.subr.mxu0 0.0
    %957 = vmatpush1.msra.mxu0 0.0
    %958 = vmatprep.subr.mxu0 0.0
    %959 = vmatpush1.msra.mxu0 0.0
    %960 = vmatprep.subr.mxu0 0.0
    %961 = vmatpush1.msra.mxu0 0.0
    %962 = vmatprep.subr.mxu0 0.0
    %963 = vmatpush1.msra.mxu0 0.0
    %964 = vmatprep.subr.mxu0 0.0
    %965 = vmatpush1.msra.mxu0 0.0
    %966 = vmatprep.subr.mxu0 0.0
    %967 = vmatpush1.msra.mxu0 0.0
    %968 = vmatprep.subr.mxu0 0.0
    %969 = vmatpush1.msra.mxu0 0.0
    %970 = vmatprep.mubr.f32.mxu0 0.0
    %971 = vmatmul.mubr.f32.gmra.mrb[0].mxu0 %v904
    %v972 = vpop.f32.mrb[0].mxu0
    %v973 = vadd.f32 0.0, %v972
    %v974 = vpop.f32.mrb[0].mxu0
    %975 = vdwg.mxu0
    %v976 = vadd.f32 %v903, %v973
    %v977 = vxor.u32 %v976, 2147483648
    %v978 = vmul.f32 %v977, 1.442695
    %v979 = vpow.pop %v978
    %v980 = vadd.f32 %v979, 1.0
    %v981 = vrcp.pop %v980
    %v982 = vmul.f32 1.0, %v981
    %v983 = vtanh.pop %v976
    %v984 = vmul.f32 %v982, %v889
    %986 = vrot.lane.b32.xlu0 %v983, 64
    %v987 = vpop.permute.xlu0 %986
    %v989 = vmul.f32 %v982, %v987
    %991 = vrot.lane.b32.xlu0 %v989, 32
    %v992 = vpop.permute.xlu0 %991
    %v994 = vadd.f32 %v984, %v992
    %v995 = vtanh.pop %v994
    %997 = vrot.lane.b32.xlu0 %v995, 64
    %v998 = vpop.permute.xlu0 %997
    %v1000 = vmul.f32 %v982, %v998
    %1002 = vrot.lane.b32.xlu0 %v1000, 32
    %v1003 = vpop.permute.xlu0 %1002
    %s1005 = scalar_lea.vmem [#allocation2], 28
    %1006 = vst.msk [vmem:[%s1005] sm:$0xf] %vm270, %v1003
    %v1007 = vld [vmem:[#allocation2] sm:$0xff]
    %v1008 = vld [vmem:[#allocation2 + $0x8] sm:$0xff]
    %v1009 = vld [vmem:[#allocation2 + $0x10] sm:$0xff]
    %v1010 = vld [vmem:[#allocation2 + $0x18] sm:$0xff]
    %v1011 = vld [vmem:[%s4] sm:$0xff]
    %v1012 = vld [vmem:[%s4 + $0x8] sm:$0xff]
    %v1013 = vld [vmem:[%s4 + $0x10] sm:$0xff]
    %v1014 = vld [vmem:[%s4 + $0x18] sm:$0xff]
    %v1015 = vld [vmem:[%s6] sm:$0x1]
    %v1017 = vlaneseq
    %v1018 = vshrl.u32 %v1017, 7
    %v1019 = vsub.s32 0, %v1018
    %v1020 = vrot.slane %v1015, %v1019
    %v1023 = vsel %vm167, %v1007, 0
    %v1026 = vsel %vm167, %v1008, 0
    %v1029 = vsel %vm167, %v1009, 0
    %v1032 = vsel %vm167, %v1010, 0
    %1034 = vmatprep.subr.mxu0 0.0
    %1035 = vmatpush1.msra.mxu0 %v1011
    %1036 = vmatprep.subr.mxu0 0.0
    %1037 = vmatpush1.msra.mxu0 %v1012
    %1038 = vmatprep.subr.mxu0 0.0
    %1039 = vmatpush1.msra.mxu0 %v1013
    %1040 = vmatprep.subr.mxu0 0.0
    %1041 = vmatpush1.msra.mxu0 %v1014
    %1042 = vmatprep.subr.mxu0 0.0
    %1043 = vmatpush1.msra.mxu0 0.0
    %1044 = vmatprep.subr.mxu0 0.0
    %1045 = vmatpush1.msra.mxu0 0.0
    %1046 = vmatprep.subr.mxu0 0.0
    %1047 = vmatpush1.msra.mxu0 0.0
    %1048 = vmatprep.subr.mxu0 0.0
    %1049 = vmatpush1.msra.mxu0 0.0
    %1050 = vmatprep.subr.mxu0 0.0
    %1051 = vmatpush1.msra.mxu0 0.0
    %1052 = vmatprep.subr.mxu0 0.0
    %1053 = vmatpush1.msra.mxu0 0.0
    %1054 = vmatprep.subr.mxu0 0.0
    %1055 = vmatpush1.msra.mxu0 0.0
    %1056 = vmatprep.subr.mxu0 0.0
    %1057 = vmatpush1.msra.mxu0 0.0
    %1058 = vmatprep.subr.mxu0 0.0
    %1059 = vmatpush1.msra.mxu0 0.0
    %1060 = vmatprep.subr.mxu0 0.0
    %1061 = vmatpush1.msra.mxu0 0.0
    %1062 = vmatprep.subr.mxu0 0.0
    %1063 = vmatpush1.msra.mxu0 0.0
    %1064 = vmatprep.subr.mxu0 0.0
    %1065 = vmatpush1.msra.mxu0 0.0
    %1066 = vmatprep.subr.mxu0 0.0
    %1067 = vmatpush1.msra.mxu0 0.0
    %1068 = vmatprep.subr.mxu0 0.0
    %1069 = vmatpush1.msra.mxu0 0.0
    %1070 = vmatprep.subr.mxu0 0.0
    %1071 = vmatpush1.msra.mxu0 0.0
    %1072 = vmatprep.subr.mxu0 0.0
    %1073 = vmatpush1.msra.mxu0 0.0
    %1074 = vmatprep.subr.mxu0 0.0
    %1075 = vmatpush1.msra.mxu0 0.0
    %1076 = vmatprep.subr.mxu0 0.0
    %1077 = vmatpush1.msra.mxu0 0.0
    %1078 = vmatprep.subr.mxu0 0.0
    %1079 = vmatpush1.msra.mxu0 0.0
    %1080 = vmatprep.subr.mxu0 0.0
    %1081 = vmatpush1.msra.mxu0 0.0
    %1082 = vmatprep.subr.mxu0 0.0
    %1083 = vmatpush1.msra.mxu0 0.0
    %1084 = vmatprep.subr.mxu0 0.0
    %1085 = vmatpush1.msra.mxu0 0.0
    %1086 = vmatprep.subr.mxu0 0.0
    %1087 = vmatpush1.msra.mxu0 0.0
    %1088 = vmatprep.subr.mxu0 0.0
    %1089 = vmatpush1.msra.mxu0 0.0
    %1090 = vmatprep.subr.mxu0 0.0
    %1091 = vmatpush1.msra.mxu0 0.0
    %1092 = vmatprep.subr.mxu0 0.0
    %1093 = vmatpush1.msra.mxu0 0.0
    %1094 = vmatprep.subr.mxu0 0.0
    %1095 = vmatpush1.msra.mxu0 0.0
    %1096 = vmatprep.subr.mxu0 0.0
    %1097 = vmatpush1.msra.mxu0 0.0
    %1098 = vmatprep.mubr.f32.mxu0 0.0
    %1099 = vmatmul.mubr.f32.gmra.mrb[0].mxu0 %v1023
    %v1100 = vpop.f32.mrb[0].mxu0
    %v1101 = vadd.f32 %v1020, %v1100
    %v1102 = vpop.f32.mrb[0].mxu0
    %1103 = vmatprep.mubr.f32.mxu0 0.0
    %1104 = vmatmul.mubr.f32.gmra.mrb[0].mxu0 %v1026
    %v1105 = vpop.f32.mrb[0].mxu0
    %v1106 = vadd.f32 %v1020, %v1105
    %v1107 = vpop.f32.mrb[0].mxu0
    %1108 = vmatprep.mubr.f32.mxu0 0.0
    %1109 = vmatmul.mubr.f32.gmra.mrb[0].mxu0 %v1029
    %v1110 = vpop.f32.mrb[0].mxu0
    %v1111 = vadd.f32 %v1020, %v1110
    %v1112 = vpop.f32.mrb[0].mxu0
    %1113 = vmatprep.mubr.f32.mxu0 0.0
    %1114 = vmatmul.mubr.f32.gmra.mrb[0].mxu0 %v1032
    %v1115 = vpop.f32.mrb[0].mxu0
    %v1116 = vadd.f32 %v1020, %v1115
    %v1117 = vpop.f32.mrb[0].mxu0
    %1118 = vdwg.mxu0
    %1119 = vst [vmem:[#allocation3] sm:$0xff] %v1101
    %1120 = vst [vmem:[#allocation3 + $0x8] sm:$0xff] %v1106
    %1121 = vst [vmem:[#allocation3 + $0x10] sm:$0xff] %v1111
    %1122 = vst [vmem:[#allocation3 + $0x18] sm:$0xff] %v1116
    %v1123 = vld [vmem:[%s5] sm:$0xff]
    %v1124 = vld [vmem:[%s5 + $0x8] sm:$0xff]
    %v1125 = vld [vmem:[%s5 + $0x10] sm:$0xff]
    %v1126 = vld [vmem:[%s5 + $0x18] sm:$0xff]
    %v1127 = vld [vmem:[#allocation3] sm:$0xf]
    %1128 = vmatprep.subr.mxu0 0.0
    %1129 = vmatpush1.msra.mxu0 %v1123
    %1130 = vmatprep.subr.mxu0 0.0
    %1131 = vmatpush1.msra.mxu0 %v1124
    %1132 = vmatprep.subr.mxu0 0.0
    %1133 = vmatpush1.msra.mxu0 %v1125
    %1134 = vmatprep.subr.mxu0 0.0
    %1135 = vmatpush1.msra.mxu0 %v1126
    %1136 = vmatprep.subr.mxu0 0.0
    %1137 = vmatpush1.msra.mxu0 0.0
    %1138 = vmatprep.subr.mxu0 0.0
    %1139 = vmatpush1.msra.mxu0 0.0
    %1140 = vmatprep.subr.mxu0 0.0
    %1141 = vmatpush1.msra.mxu0 0.0
    %1142 = vmatprep.subr.mxu0 0.0
    %1143 = vmatpush1.msra.mxu0 0.0
    %1144 = vmatprep.subr.mxu0 0.0
    %1145 = vmatpush1.msra.mxu0 0.0
    %1146 = vmatprep.subr.mxu0 0.0
    %1147 = vmatpush1.msra.mxu0 0.0
    %1148 = vmatprep.subr.mxu0 0.0
    %1149 = vmatpush1.msra.mxu0 0.0
    %1150 = vmatprep.subr.mxu0 0.0
    %1151 = vmatpush1.msra.mxu0 0.0
    %1152 = vmatprep.subr.mxu0 0.0
    %1153 = vmatpush1.msra.mxu0 0.0
    %1154 = vmatprep.subr.mxu0 0.0
    %1155 = vmatpush1.msra.mxu0 0.0
    %1156 = vmatprep.subr.mxu0 0.0
    %1157 = vmatpush1.msra.mxu0 0.0
    %1158 = vmatprep.subr.mxu0 0.0
    %1159 = vmatpush1.msra.mxu0 0.0
    %1160 = vmatprep.subr.mxu0 0.0
    %1161 = vmatpush1.msra.mxu0 0.0
    %1162 = vmatprep.subr.mxu0 0.0
    %1163 = vmatpush1.msra.mxu0 0.0
    %1164 = vmatprep.subr.mxu0 0.0
    %1165 = vmatpush1.msra.mxu0 0.0
    %1166 = vmatprep.subr.mxu0 0.0
    %1167 = vmatpush1.msra.mxu0 0.0
    %1168 = vmatprep.subr.mxu0 0.0
    %1169 = vmatpush1.msra.mxu0 0.0
    %1170 = vmatprep.subr.mxu0 0.0
    %1171 = vmatpush1.msra.mxu0 0.0
    %1172 = vmatprep.subr.mxu0 0.0
    %1173 = vmatpush1.msra.mxu0 0.0
    %1174 = vmatprep.subr.mxu0 0.0
    %1175 = vmatpush1.msra.mxu0 0.0
    %1176 = vmatprep.subr.mxu0 0.0
    %1177 = vmatpush1.msra.mxu0 0.0
    %1178 = vmatprep.subr.mxu0 0.0
    %1179 = vmatpush1.msra.mxu0 0.0
    %1180 = vmatprep.subr.mxu0 0.0
    %1181 = vmatpush1.msra.mxu0 0.0
    %1182 = vmatprep.subr.mxu0 0.0
    %1183 = vmatpush1.msra.mxu0 0.0
    %1184 = vmatprep.subr.mxu0 0.0
    %1185 = vmatpush1.msra.mxu0 0.0
    %1186 = vmatprep.subr.mxu0 0.0
    %1187 = vmatpush1.msra.mxu0 0.0
    %1188 = vmatprep.subr.mxu0 0.0
    %1189 = vmatpush1.msra.mxu0 0.0
    %1190 = vmatprep.subr.mxu0 0.0
    %1191 = vmatpush1.msra.mxu0 0.0
    %1192 = vmatprep.mubr.f32.mxu0 0.0
    %1193 = vmatmul.mubr.f32.gmra.mrb[0].mxu0 %v169
    %v1194 = vpop.f32.mrb[0].mxu0
    %v1195 = vadd.f32 0.0, %v1194
    %v1196 = vpop.f32.mrb[0].mxu0
    %1197 = vdwg.mxu0
    %v1198 = vadd.f32 %v1127, %v1195
    %v1199 = vxor.u32 %v1198, 2147483648
    %v1200 = vmul.f32 %v1199, 1.442695
    %v1201 = vpow.pop %v1200
    %v1202 = vadd.f32 %v1201, 1.0
    %v1203 = vrcp.pop %v1202
    %v1204 = vmul.f32 1.0, %v1203
    %v1205 = vtanh.pop %v1198
    %v1206 = vmul.f32 %v1204, 0.0
    %1208 = vrot.lane.b32.xlu0 %v1205, 64
    %v1209 = vpop.permute.xlu0 %1208
    %v1211 = vmul.f32 %v1204, %v1209
    %1213 = vrot.lane.b32.xlu0 %v1211, 32
    %v1214 = vpop.permute.xlu0 %1213
    %v1216 = vadd.f32 %v1206, %v1214
    %v1217 = vtanh.pop %v1216
    %1219 = vrot.lane.b32.xlu0 %v1217, 64
    %v1220 = vpop.permute.xlu0 %1219
    %v1222 = vmul.f32 %v1204, %v1220
    %v1223 = vld [vmem:[%s272] sm:$0xf]
    %1225 = vrot.lane.b32.xlu0 %v1222, 32
    %v1226 = vpop.permute.xlu0 %1225
    %v1227 = vsel %vm167, %v1226, 0
    %1229 = vmatprep.subr.mxu0 0.0
    %1230 = vmatpush1.msra.mxu0 %v1123
    %1231 = vmatprep.subr.mxu0 0.0
    %1232 = vmatpush1.msra.mxu0 %v1124
    %1233 = vmatprep.subr.mxu0 0.0
    %1234 = vmatpush1.msra.mxu0 %v1125
    %1235 = vmatprep.subr.mxu0 0.0
    %1236 = vmatpush1.msra.mxu0 %v1126
    %1237 = vmatprep.subr.mxu0 0.0
    %1238 = vmatpush1.msra.mxu0 0.0
    %1239 = vmatprep.subr.mxu0 0.0
    %1240 = vmatpush1.msra.mxu0 0.0
    %1241 = vmatprep.subr.mxu0 0.0
    %1242 = vmatpush1.msra.mxu0 0.0
    %1243 = vmatprep.subr.mxu0 0.0
    %1244 = vmatpush1.msra.mxu0 0.0
    %1245 = vmatprep.subr.mxu0 0.0
    %1246 = vmatpush1.msra.mxu0 0.0
    %1247 = vmatprep.subr.mxu0 0.0
    %1248 = vmatpush1.msra.mxu0 0.0
    %1249 = vmatprep.subr.mxu0 0.0
    %1250 = vmatpush1.msra.mxu0 0.0
    %1251 = vmatprep.subr.mxu0 0.0
    %1252 = vmatpush1.msra.mxu0 0.0
    %1253 = vmatprep.subr.mxu0 0.0
    %1254 = vmatpush1.msra.mxu0 0.0
    %1255 = vmatprep.subr.mxu0 0.0
    %1256 = vmatpush1.msra.mxu0 0.0
    %1257 = vmatprep.subr.mxu0 0.0
    %1258 = vmatpush1.msra.mxu0 0.0
    %1259 = vmatprep.subr.mxu0 0.0
    %1260 = vmatpush1.msra.mxu0 0.0
    %1261 = vmatprep.subr.mxu0 0.0
    %1262 = vmatpush1.msra.mxu0 0.0
    %1263 = vmatprep.subr.mxu0 0.0
    %1264 = vmatpush1.msra.mxu0 0.0
    %1265 = vmatprep.subr.mxu0 0.0
    %1266 = vmatpush1.msra.mxu0 0.0
    %1267 = vmatprep.subr.mxu0 0.0
    %1268 = vmatpush1.msra.mxu0 0.0
    %1269 = vmatprep.subr.mxu0 0.0
    %1270 = vmatpush1.msra.mxu0 0.0
    %1271 = vmatprep.subr.mxu0 0.0
    %1272 = vmatpush1.msra.mxu0 0.0
    %1273 = vmatprep.subr.mxu0 0.0
    %1274 = vmatpush1.msra.mxu0 0.0
    %1275 = vmatprep.subr.mxu0 0.0
    %1276 = vmatpush1.msra.mxu0 0.0
    %1277 = vmatprep.subr.mxu0 0.0
    %1278 = vmatpush1.msra.mxu0 0.0
    %1279 = vmatprep.subr.mxu0 0.0
    %1280 = vmatpush1.msra.mxu0 0.0
    %1281 = vmatprep.subr.mxu0 0.0
    %1282 = vmatpush1.msra.mxu0 0.0
    %1283 = vmatprep.subr.mxu0 0.0
    %1284 = vmatpush1.msra.mxu0 0.0
    %1285 = vmatprep.subr.mxu0 0.0
    %1286 = vmatpush1.msra.mxu0 0.0
    %1287 = vmatprep.subr.mxu0 0.0
    %1288 = vmatpush1.msra.mxu0 0.0
    %1289 = vmatprep.subr.mxu0 0.0
    %1290 = vmatpush1.msra.mxu0 0.0
    %1291 = vmatprep.subr.mxu0 0.0
    %1292 = vmatpush1.msra.mxu0 0.0
    %1293 = vmatprep.mubr.f32.mxu0 0.0
    %1294 = vmatmul.mubr.f32.gmra.mrb[0].mxu0 %v1227
    %v1295 = vpop.f32.mrb[0].mxu0
    %v1296 = vadd.f32 0.0, %v1295
    %v1297 = vpop.f32.mrb[0].mxu0
    %1298 = vdwg.mxu0
    %v1299 = vadd.f32 %v1223, %v1296
    %v1300 = vxor.u32 %v1299, 2147483648
    %v1301 = vmul.f32 %v1300, 1.442695
    %v1302 = vpow.pop %v1301
    %v1303 = vadd.f32 %v1302, 1.0
    %v1304 = vrcp.pop %v1303
    %v1305 = vmul.f32 1.0, %v1304
    %v1306 = vtanh.pop %v1299
    %v1307 = vmul.f32 %v1305, %v1216
    %1309 = vrot.lane.b32.xlu0 %v1306, 64
    %v1310 = vpop.permute.xlu0 %1309
    %v1312 = vmul.f32 %v1305, %v1310
    %1314 = vrot.lane.b32.xlu0 %v1312, 32
    %v1315 = vpop.permute.xlu0 %1314
    %v1317 = vadd.f32 %v1307, %v1315
    %v1318 = vtanh.pop %v1317
    %1320 = vrot.lane.b32.xlu0 %v1318, 64
    %v1321 = vpop.permute.xlu0 %1320
    %v1323 = vmul.f32 %v1305, %v1321
    %v1324 = vld [vmem:[%s377] sm:$0xf]
    %1326 = vrot.lane.b32.xlu0 %v1323, 32
    %v1327 = vpop.permute.xlu0 %1326
    %v1328 = vsel %vm167, %v1327, 0
    %1330 = vmatprep.subr.mxu0 0.0
    %1331 = vmatpush1.msra.mxu0 %v1123
    %1332 = vmatprep.subr.mxu0 0.0
    %1333 = vmatpush1.msra.mxu0 %v1124
    %1334 = vmatprep.subr.mxu0 0.0
    %1335 = vmatpush1.msra.mxu0 %v1125
    %1336 = vmatprep.subr.mxu0 0.0
    %1337 = vmatpush1.msra.mxu0 %v1126
    %1338 = vmatprep.subr.mxu0 0.0
    %1339 = vmatpush1.msra.mxu0 0.0
    %1340 = vmatprep.subr.mxu0 0.0
    %1341 = vmatpush1.msra.mxu0 0.0
    %1342 = vmatprep.subr.mxu0 0.0
    %1343 = vmatpush1.msra.mxu0 0.0
    %1344 = vmatprep.subr.mxu0 0.0
    %1345 = vmatpush1.msra.mxu0 0.0
    %1346 = vmatprep.subr.mxu0 0.0
    %1347 = vmatpush1.msra.mxu0 0.0
    %1348 = vmatprep.subr.mxu0 0.0
    %1349 = vmatpush1.msra.mxu0 0.0
    %1350 = vmatprep.subr.mxu0 0.0
    %1351 = vmatpush1.msra.mxu0 0.0
    %1352 = vmatprep.subr.mxu0 0.0
    %1353 = vmatpush1.msra.mxu0 0.0
    %1354 = vmatprep.subr.mxu0 0.0
    %1355 = vmatpush1.msra.mxu0 0.0
    %1356 = vmatprep.subr.mxu0 0.0
    %1357 = vmatpush1.msra.mxu0 0.0
    %1358 = vmatprep.subr.mxu0 0.0
    %1359 = vmatpush1.msra.mxu0 0.0
    %1360 = vmatprep.subr.mxu0 0.0
    %1361 = vmatpush1.msra.mxu0 0.0
    %1362 = vmatprep.subr.mxu0 0.0
    %1363 = vmatpush1.msra.mxu0 0.0
    %1364 = vmatprep.subr.mxu0 0.0
    %1365 = vmatpush1.msra.mxu0 0.0
    %1366 = vmatprep.subr.mxu0 0.0
    %1367 = vmatpush1.msra.mxu0 0.0
    %1368 = vmatprep.subr.mxu0 0.0
    %1369 = vmatpush1.msra.mxu0 0.0
    %1370 = vmatprep.subr.mxu0 0.0
    %1371 = vmatpush1.msra.mxu0 0.0
    %1372 = vmatprep.subr.mxu0 0.0
    %1373 = vmatpush1.msra.mxu0 0.0
    %1374 = vmatprep.subr.mxu0 0.0
    %1375 = vmatpush1.msra.mxu0 0.0
    %1376 = vmatprep.subr.mxu0 0.0
    %1377 = vmatpush1.msra.mxu0 0.0
    %1378 = vmatprep.subr.mxu0 0.0
    %1379 = vmatpush1.msra.mxu0 0.0
    %1380 = vmatprep.subr.mxu0 0.0
    %1381 = vmatpush1.msra.mxu0 0.0
    %1382 = vmatprep.subr.mxu0 0.0
    %1383 = vmatpush1.msra.mxu0 0.0
    %1384 = vmatprep.subr.mxu0 0.0
    %1385 = vmatpush1.msra.mxu0 0.0
    %1386 = vmatprep.subr.mxu0 0.0
    %1387 = vmatpush1.msra.mxu0 0.0
    %1388 = vmatprep.subr.mxu0 0.0
    %1389 = vmatpush1.msra.mxu0 0.0
    %1390 = vmatprep.subr.mxu0 0.0
    %1391 = vmatpush1.msra.mxu0 0.0
    %1392 = vmatprep.subr.mxu0 0.0
    %1393 = vmatpush1.msra.mxu0 0.0
    %1394 = vmatprep.mubr.f32.mxu0 0.0
    %1395 = vmatmul.mubr.f32.gmra.mrb[0].mxu0 %v1328
    %v1396 = vpop.f32.mrb[0].mxu0
    %v1397 = vadd.f32 0.0, %v1396
    %v1398 = vpop.f32.mrb[0].mxu0
    %1399 = vdwg.mxu0
    %v1400 = vadd.f32 %v1324, %v1397
    %v1401 = vxor.u32 %v1400, 2147483648
    %v1402 = vmul.f32 %v1401, 1.442695
    %v1403 = vpow.pop %v1402
    %v1404 = vadd.f32 %v1403, 1.0
    %v1405 = vrcp.pop %v1404
    %v1406 = vmul.f32 1.0, %v1405
    %v1407 = vtanh.pop %v1400
    %v1408 = vmul.f32 %v1406, %v1317
    %1410 = vrot.lane.b32.xlu0 %v1407, 64
    %v1411 = vpop.permute.xlu0 %1410
    %v1413 = vmul.f32 %v1406, %v1411
    %1415 = vrot.lane.b32.xlu0 %v1413, 32
    %v1416 = vpop.permute.xlu0 %1415
    %v1418 = vadd.f32 %v1408, %v1416
    %v1419 = vtanh.pop %v1418
    %1421 = vrot.lane.b32.xlu0 %v1419, 64
    %v1422 = vpop.permute.xlu0 %1421
    %v1424 = vmul.f32 %v1406, %v1422
    %v1425 = vld [vmem:[%s482] sm:$0xf]
    %1427 = vrot.lane.b32.xlu0 %v1424, 32
    %v1428 = vpop.permute.xlu0 %1427
    %v1429 = vsel %vm167, %v1428, 0
    %1431 = vmatprep.subr.mxu0 0.0
    %1432 = vmatpush1.msra.mxu0 %v1123
    %1433 = vmatprep.subr.mxu0 0.0
    %1434 = vmatpush1.msra.mxu0 %v1124
    %1435 = vmatprep.subr.mxu0 0.0
    %1436 = vmatpush1.msra.mxu0 %v1125
    %1437 = vmatprep.subr.mxu0 0.0
    %1438 = vmatpush1.msra.mxu0 %v1126
    %1439 = vmatprep.subr.mxu0 0.0
    %1440 = vmatpush1.msra.mxu0 0.0
    %1441 = vmatprep.subr.mxu0 0.0
    %1442 = vmatpush1.msra.mxu0 0.0
    %1443 = vmatprep.subr.mxu0 0.0
    %1444 = vmatpush1.msra.mxu0 0.0
    %1445 = vmatprep.subr.mxu0 0.0
    %1446 = vmatpush1.msra.mxu0 0.0
    %1447 = vmatprep.subr.mxu0 0.0
    %1448 = vmatpush1.msra.mxu0 0.0
    %1449 = vmatprep.subr.mxu0 0.0
    %1450 = vmatpush1.msra.mxu0 0.0
    %1451 = vmatprep.subr.mxu0 0.0
    %1452 = vmatpush1.msra.mxu0 0.0
    %1453 = vmatprep.subr.mxu0 0.0
    %1454 = vmatpush1.msra.mxu0 0.0
    %1455 = vmatprep.subr.mxu0 0.0
    %1456 = vmatpush1.msra.mxu0 0.0
    %1457 = vmatprep.subr.mxu0 0.0
    %1458 = vmatpush1.msra.mxu0 0.0
    %1459 = vmatprep.subr.mxu0 0.0
    %1460 = vmatpush1.msra.mxu0 0.0
    %1461 = vmatprep.subr.mxu0 0.0
    %1462 = vmatpush1.msra.mxu0 0.0
    %1463 = vmatprep.subr.mxu0 0.0
    %1464 = vmatpush1.msra.mxu0 0.0
    %1465 = vmatprep.subr.mxu0 0.0
    %1466 = vmatpush1.msra.mxu0 0.0
    %1467 = vmatprep.subr.mxu0 0.0
    %1468 = vmatpush1.msra.mxu0 0.0
    %1469 = vmatprep.subr.mxu0 0.0
    %1470 = vmatpush1.msra.mxu0 0.0
    %1471 = vmatprep.subr.mxu0 0.0
    %1472 = vmatpush1.msra.mxu0 0.0
    %1473 = vmatprep.subr.mxu0 0.0
    %1474 = vmatpush1.msra.mxu0 0.0
    %1475 = vmatprep.subr.mxu0 0.0
    %1476 = vmatpush1.msra.mxu0 0.0
    %1477 = vmatprep.subr.mxu0 0.0
    %1478 = vmatpush1.msra.mxu0 0.0
    %1479 = vmatprep.subr.mxu0 0.0
    %1480 = vmatpush1.msra.mxu0 0.0
    %1481 = vmatprep.subr.mxu0 0.0
    %1482 = vmatpush1.msra.mxu0 0.0
    %1483 = vmatprep.subr.mxu0 0.0
    %1484 = vmatpush1.msra.mxu0 0.0
    %1485 = vmatprep.subr.mxu0 0.0
    %1486 = vmatpush1.msra.mxu0 0.0
    %1487 = vmatprep.subr.mxu0 0.0
    %1488 = vmatpush1.msra.mxu0 0.0
    %1489 = vmatprep.subr.mxu0 0.0
    %1490 = vmatpush1.msra.mxu0 0.0
    %1491 = vmatprep.subr.mxu0 0.0
    %1492 = vmatpush1.msra.mxu0 0.0
    %1493 = vmatprep.subr.mxu0 0.0
    %1494 = vmatpush1.msra.mxu0 0.0
    %1495 = vmatprep.mubr.f32.mxu0 0.0
    %1496 = vmatmul.mubr.f32.gmra.mrb[0].mxu0 %v1429
    %v1497 = vpop.f32.mrb[0].mxu0
    %v1498 = vadd.f32 0.0, %v1497
    %v1499 = vpop.f32.mrb[0].mxu0
    %1500 = vdwg.mxu0
    %v1501 = vadd.f32 %v1425, %v1498
    %v1502 = vxor.u32 %v1501, 2147483648
    %v1503 = vmul.f32 %v1502, 1.442695
    %v1504 = vpow.pop %v1503
    %v1505 = vadd.f32 %v1504, 1.0
    %v1506 = vrcp.pop %v1505
    %v1507 = vmul.f32 1.0, %v1506
    %v1508 = vtanh.pop %v1501
    %v1509 = vmul.f32 %v1507, %v1418
    %1511 = vrot.lane.b32.xlu0 %v1508, 64
    %v1512 = vpop.permute.xlu0 %1511
    %v1514 = vmul.f32 %v1507, %v1512
    %1516 = vrot.lane.b32.xlu0 %v1514, 32
    %v1517 = vpop.permute.xlu0 %1516
    %v1519 = vadd.f32 %v1509, %v1517
    %v1520 = vtanh.pop %v1519
    %1522 = vrot.lane.b32.xlu0 %v1520, 64
    %v1523 = vpop.permute.xlu0 %1522
    %v1525 = vmul.f32 %v1507, %v1523
    %v1526 = vld [vmem:[%s587] sm:$0xf]
    %1528 = vrot.lane.b32.xlu0 %v1525, 32
    %v1529 = vpop.permute.xlu0 %1528
    %v1530 = vsel %vm167, %v1529, 0
    %1532 = vmatprep.subr.mxu0 0.0
    %1533 = vmatpush1.msra.mxu0 %v1123
    %1534 = vmatprep.subr.mxu0 0.0
    %1535 = vmatpush1.msra.mxu0 %v1124
    %1536 = vmatprep.subr.mxu0 0.0
    %1537 = vmatpush1.msra.mxu0 %v1125
    %1538 = vmatprep.subr.mxu0 0.0
    %1539 = vmatpush1.msra.mxu0 %v1126
    %1540 = vmatprep.subr.mxu0 0.0
    %1541 = vmatpush1.msra.mxu0 0.0
    %1542 = vmatprep.subr.mxu0 0.0
    %1543 = vmatpush1.msra.mxu0 0.0
    %1544 = vmatprep.subr.mxu0 0.0
    %1545 = vmatpush1.msra.mxu0 0.0
    %1546 = vmatprep.subr.mxu0 0.0
    %1547 = vmatpush1.msra.mxu0 0.0
    %1548 = vmatprep.subr.mxu0 0.0
    %1549 = vmatpush1.msra.mxu0 0.0
    %1550 = vmatprep.subr.mxu0 0.0
    %1551 = vmatpush1.msra.mxu0 0.0
    %1552 = vmatprep.subr.mxu0 0.0
    %1553 = vmatpush1.msra.mxu0 0.0
    %1554 = vmatprep.subr.mxu0 0.0
    %1555 = vmatpush1.msra.mxu0 0.0
    %1556 = vmatprep.subr.mxu0 0.0
    %1557 = vmatpush1.msra.mxu0 0.0
    %1558 = vmatprep.subr.mxu0 0.0
    %1559 = vmatpush1.msra.mxu0 0.0
    %1560 = vmatprep.subr.mxu0 0.0
    %1561 = vmatpush1.msra.mxu0 0.0
    %1562 = vmatprep.subr.mxu0 0.0
    %1563 = vmatpush1.msra.mxu0 0.0
    %1564 = vmatprep.subr.mxu0 0.0
    %1565 = vmatpush1.msra.mxu0 0.0
    %1566 = vmatprep.subr.mxu0 0.0
    %1567 = vmatpush1.msra.mxu0 0.0
    %1568 = vmatprep.subr.mxu0 0.0
    %1569 = vmatpush1.msra.mxu0 0.0
    %1570 = vmatprep.subr.mxu0 0.0
    %1571 = vmatpush1.msra.mxu0 0.0
    %1572 = vmatprep.subr.mxu0 0.0
    %1573 = vmatpush1.msra.mxu0 0.0
    %1574 = vmatprep.subr.mxu0 0.0
    %1575 = vmatpush1.msra.mxu0 0.0
    %1576 = vmatprep.subr.mxu0 0.0
    %1577 = vmatpush1.msra.mxu0 0.0
    %1578 = vmatprep.subr.mxu0 0.0
    %1579 = vmatpush1.msra.mxu0 0.0
    %1580 = vmatprep.subr.mxu0 0.0
    %1581 = vmatpush1.msra.mxu0 0.0
    %1582 = vmatprep.subr.mxu0 0.0
    %1583 = vmatpush1.msra.mxu0 0.0
    %1584 = vmatprep.subr.mxu0 0.0
    %1585 = vmatpush1.msra.mxu0 0.0
    %1586 = vmatprep.subr.mxu0 0.0
    %1587 = vmatpush1.msra.mxu0 0.0
    %1588 = vmatprep.subr.mxu0 0.0
    %1589 = vmatpush1.msra.mxu0 0.0
    %1590 = vmatprep.subr.mxu0 0.0
    %1591 = vmatpush1.msra.mxu0 0.0
    %1592 = vmatprep.subr.mxu0 0.0
    %1593 = vmatpush1.msra.mxu0 0.0
    %1594 = vmatprep.subr.mxu0 0.0
    %1595 = vmatpush1.msra.mxu0 0.0
    %1596 = vmatprep.mubr.f32.mxu0 0.0
    %1597 = vmatmul.mubr.f32.gmra.mrb[0].mxu0 %v1530
    %v1598 = vpop.f32.mrb[0].mxu0
    %v1599 = vadd.f32 0.0, %v1598
    %v1600 = vpop.f32.mrb[0].mxu0
    %1601 = vdwg.mxu0
    %v1602 = vadd.f32 %v1526, %v1599
    %v1603 = vxor.u32 %v1602, 2147483648
    %v1604 = vmul.f32 %v1603, 1.442695
    %v1605 = vpow.pop %v1604
    %v1606 = vadd.f32 %v1605, 1.0
    %v1607 = vrcp.pop %v1606
    %v1608 = vmul.f32 1.0, %v1607
    %v1609 = vtanh.pop %v1602
    %v1610 = vmul.f32 %v1608, %v1519
    %1612 = vrot.lane.b32.xlu0 %v1609, 64
    %v1613 = vpop.permute.xlu0 %1612
    %v1615 = vmul.f32 %v1608, %v1613
    %1617 = vrot.lane.b32.xlu0 %v1615, 32
    %v1618 = vpop.permute.xlu0 %1617
    %v1620 = vadd.f32 %v1610, %v1618
    %v1621 = vtanh.pop %v1620
    %1623 = vrot.lane.b32.xlu0 %v1621, 64
    %v1624 = vpop.permute.xlu0 %1623
    %v1626 = vmul.f32 %v1608, %v1624
    %v1627 = vld [vmem:[%s692] sm:$0xf]
    %1629 = vrot.lane.b32.xlu0 %v1626, 32
    %v1630 = vpop.permute.xlu0 %1629
    %v1631 = vsel %vm167, %v1630, 0
    %1633 = vmatprep.subr.mxu0 0.0
    %1634 = vmatpush1.msra.mxu0 %v1123
    %1635 = vmatprep.subr.mxu0 0.0
    %1636 = vmatpush1.msra.mxu0 %v1124
    %1637 = vmatprep.subr.mxu0 0.0
    %1638 = vmatpush1.msra.mxu0 %v1125
    %1639 = vmatprep.subr.mxu0 0.0
    %1640 = vmatpush1.msra.mxu0 %v1126
    %1641 = vmatprep.subr.mxu0 0.0
    %1642 = vmatpush1.msra.mxu0 0.0
    %1643 = vmatprep.subr.mxu0 0.0
    %1644 = vmatpush1.msra.mxu0 0.0
    %1645 = vmatprep.subr.mxu0 0.0
    %1646 = vmatpush1.msra.mxu0 0.0
    %1647 = vmatprep.subr.mxu0 0.0
    %1648 = vmatpush1.msra.mxu0 0.0
    %1649 = vmatprep.subr.mxu0 0.0
    %1650 = vmatpush1.msra.mxu0 0.0
    %1651 = vmatprep.subr.mxu0 0.0
    %1652 = vmatpush1.msra.mxu0 0.0
    %1653 = vmatprep.subr.mxu0 0.0
    %1654 = vmatpush1.msra.mxu0 0.0
    %1655 = vmatprep.subr.mxu0 0.0
    %1656 = vmatpush1.msra.mxu0 0.0
    %1657 = vmatprep.subr.mxu0 0.0
    %1658 = vmatpush1.msra.mxu0 0.0
    %1659 = vmatprep.subr.mxu0 0.0
    %1660 = vmatpush1.msra.mxu0 0.0
    %1661 = vmatprep.subr.mxu0 0.0
    %1662 = vmatpush1.msra.mxu0 0.0
    %1663 = vmatprep.subr.mxu0 0.0
    %1664 = vmatpush1.msra.mxu0 0.0
    %1665 = vmatprep.subr.mxu0 0.0
    %1666 = vmatpush1.msra.mxu0 0.0
    %1667 = vmatprep.subr.mxu0 0.0
    %1668 = vmatpush1.msra.mxu0 0.0
    %1669 = vmatprep.subr.mxu0 0.0
    %1670 = vmatpush1.msra.mxu0 0.0
    %1671 = vmatprep.subr.mxu0 0.0
    %1672 = vmatpush1.msra.mxu0 0.0
    %1673 = vmatprep.subr.mxu0 0.0
    %1674 = vmatpush1.msra.mxu0 0.0
    %1675 = vmatprep.subr.mxu0 0.0
    %1676 = vmatpush1.msra.mxu0 0.0
    %1677 = vmatprep.subr.mxu0 0.0
    %1678 = vmatpush1.msra.mxu0 0.0
    %1679 = vmatprep.subr.mxu0 0.0
    %1680 = vmatpush1.msra.mxu0 0.0
    %1681 = vmatprep.subr.mxu0 0.0
    %1682 = vmatpush1.msra.mxu0 0.0
    %1683 = vmatprep.subr.mxu0 0.0
    %1684 = vmatpush1.msra.mxu0 0.0
    %1685 = vmatprep.subr.mxu0 0.0
    %1686 = vmatpush1.msra.mxu0 0.0
    %1687 = vmatprep.subr.mxu0 0.0
    %1688 = vmatpush1.msra.mxu0 0.0
    %1689 = vmatprep.subr.mxu0 0.0
    %1690 = vmatpush1.msra.mxu0 0.0
    %1691 = vmatprep.subr.mxu0 0.0
    %1692 = vmatpush1.msra.mxu0 0.0
    %1693 = vmatprep.subr.mxu0 0.0
    %1694 = vmatpush1.msra.mxu0 0.0
    %1695 = vmatprep.subr.mxu0 0.0
    %1696 = vmatpush1.msra.mxu0 0.0
    %1697 = vmatprep.mubr.f32.mxu0 0.0
    %1698 = vmatmul.mubr.f32.gmra.mrb[0].mxu0 %v1631
    %v1699 = vpop.f32.mrb[0].mxu0
    %v1700 = vadd.f32 0.0, %v1699
    %v1701 = vpop.f32.mrb[0].mxu0
    %1702 = vdwg.mxu0
    %v1703 = vadd.f32 %v1627, %v1700
    %v1704 = vxor.u32 %v1703, 2147483648
    %v1705 = vmul.f32 %v1704, 1.442695
    %v1706 = vpow.pop %v1705
    %v1707 = vadd.f32 %v1706, 1.0
    %v1708 = vrcp.pop %v1707
    %v1709 = vmul.f32 1.0, %v1708
    %v1710 = vtanh.pop %v1703
    %v1711 = vmul.f32 %v1709, %v1620
    %1713 = vrot.lane.b32.xlu0 %v1710, 64
    %v1714 = vpop.permute.xlu0 %1713
    %v1716 = vmul.f32 %v1709, %v1714
    %1718 = vrot.lane.b32.xlu0 %v1716, 32
    %v1719 = vpop.permute.xlu0 %1718
    %v1721 = vadd.f32 %v1711, %v1719
    %v1722 = vtanh.pop %v1721
    %1724 = vrot.lane.b32.xlu0 %v1722, 64
    %v1725 = vpop.permute.xlu0 %1724
    %v1727 = vmul.f32 %v1709, %v1725
    %v1728 = vld [vmem:[%s797] sm:$0xf]
    %1730 = vrot.lane.b32.xlu0 %v1727, 32
    %v1731 = vpop.permute.xlu0 %1730
    %v1732 = vsel %vm167, %v1731, 0
    %1734 = vmatprep.subr.mxu0 0.0
    %1735 = vmatpush1.msra.mxu0 %v1123
    %1736 = vmatprep.subr.mxu0 0.0
    %1737 = vmatpush1.msra.mxu0 %v1124
    %1738 = vmatprep.subr.mxu0 0.0
    %1739 = vmatpush1.msra.mxu0 %v1125
    %1740 = vmatprep.subr.mxu0 0.0
    %1741 = vmatpush1.msra.mxu0 %v1126
    %1742 = vmatprep.subr.mxu0 0.0
    %1743 = vmatpush1.msra.mxu0 0.0
    %1744 = vmatprep.subr.mxu0 0.0
    %1745 = vmatpush1.msra.mxu0 0.0
    %1746 = vmatprep.subr.mxu0 0.0
    %1747 = vmatpush1.msra.mxu0 0.0
    %1748 = vmatprep.subr.mxu0 0.0
    %1749 = vmatpush1.msra.mxu0 0.0
    %1750 = vmatprep.subr.mxu0 0.0
    %1751 = vmatpush1.msra.mxu0 0.0
    %1752 = vmatprep.subr.mxu0 0.0
    %1753 = vmatpush1.msra.mxu0 0.0
    %1754 = vmatprep.subr.mxu0 0.0
    %1755 = vmatpush1.msra.mxu0 0.0
    %1756 = vmatprep.subr.mxu0 0.0
    %1757 = vmatpush1.msra.mxu0 0.0
    %1758 = vmatprep.subr.mxu0 0.0
    %1759 = vmatpush1.msra.mxu0 0.0
    %1760 = vmatprep.subr.mxu0 0.0
    %1761 = vmatpush1.msra.mxu0 0.0
    %1762 = vmatprep.subr.mxu0 0.0
    %1763 = vmatpush1.msra.mxu0 0.0
    %1764 = vmatprep.subr.mxu0 0.0
    %1765 = vmatpush1.msra.mxu0 0.0
    %1766 = vmatprep.subr.mxu0 0.0
    %1767 = vmatpush1.msra.mxu0 0.0
    %1768 = vmatprep.subr.mxu0 0.0
    %1769 = vmatpush1.msra.mxu0 0.0
    %1770 = vmatprep.subr.mxu0 0.0
    %1771 = vmatpush1.msra.mxu0 0.0
    %1772 = vmatprep.subr.mxu0 0.0
    %1773 = vmatpush1.msra.mxu0 0.0
    %1774 = vmatprep.subr.mxu0 0.0
    %1775 = vmatpush1.msra.mxu0 0.0
    %1776 = vmatprep.subr.mxu0 0.0
    %1777 = vmatpush1.msra.mxu0 0.0
    %1778 = vmatprep.subr.mxu0 0.0
    %1779 = vmatpush1.msra.mxu0 0.0
    %1780 = vmatprep.subr.mxu0 0.0
    %1781 = vmatpush1.msra.mxu0 0.0
    %1782 = vmatprep.subr.mxu0 0.0
    %1783 = vmatpush1.msra.mxu0 0.0
    %1784 = vmatprep.subr.mxu0 0.0
    %1785 = vmatpush1.msra.mxu0 0.0
    %1786 = vmatprep.subr.mxu0 0.0
    %1787 = vmatpush1.msra.mxu0 0.0
    %1788 = vmatprep.subr.mxu0 0.0
    %1789 = vmatpush1.msra.mxu0 0.0
    %1790 = vmatprep.subr.mxu0 0.0
    %1791 = vmatpush1.msra.mxu0 0.0
    %1792 = vmatprep.subr.mxu0 0.0
    %1793 = vmatpush1.msra.mxu0 0.0
    %1794 = vmatprep.subr.mxu0 0.0
    %1795 = vmatpush1.msra.mxu0 0.0
    %1796 = vmatprep.subr.mxu0 0.0
    %1797 = vmatpush1.msra.mxu0 0.0
    %1798 = vmatprep.mubr.f32.mxu0 0.0
    %1799 = vmatmul.mubr.f32.gmra.mrb[0].mxu0 %v1732
    %v1800 = vpop.f32.mrb[0].mxu0
    %v1801 = vadd.f32 0.0, %v1800
    %v1802 = vpop.f32.mrb[0].mxu0
    %1803 = vdwg.mxu0
    %v1804 = vadd.f32 %v1728, %v1801
    %v1805 = vxor.u32 %v1804, 2147483648
    %v1806 = vmul.f32 %v1805, 1.442695
    %v1807 = vpow.pop %v1806
    %v1808 = vadd.f32 %v1807, 1.0
    %v1809 = vrcp.pop %v1808
    %v1810 = vmul.f32 1.0, %v1809
    %v1811 = vtanh.pop %v1804
    %v1812 = vmul.f32 %v1810, %v1721
    %1814 = vrot.lane.b32.xlu0 %v1811, 64
    %v1815 = vpop.permute.xlu0 %1814
    %v1817 = vmul.f32 %v1810, %v1815
    %1819 = vrot.lane.b32.xlu0 %v1817, 32
    %v1820 = vpop.permute.xlu0 %1819
    %v1822 = vadd.f32 %v1812, %v1820
    %v1823 = vtanh.pop %v1822
    %1825 = vrot.lane.b32.xlu0 %v1823, 64
    %v1826 = vpop.permute.xlu0 %1825
    %v1828 = vmul.f32 %v1810, %v1826
    %v1829 = vld [vmem:[%s902] sm:$0xf]
    %1831 = vrot.lane.b32.xlu0 %v1828, 32
    %v1832 = vpop.permute.xlu0 %1831
    %v1833 = vsel %vm167, %v1832, 0
    %1835 = vmatprep.subr.mxu0 0.0
    %1836 = vmatpush1.msra.mxu0 %v1123
    %1837 = vmatprep.subr.mxu0 0.0
    %1838 = vmatpush1.msra.mxu0 %v1124
    %1839 = vmatprep.subr.mxu0 0.0
    %1840 = vmatpush1.msra.mxu0 %v1125
    %1841 = vmatprep.subr.mxu0 0.0
    %1842 = vmatpush1.msra.mxu0 %v1126
    %1843 = vmatprep.subr.mxu0 0.0
    %1844 = vmatpush1.msra.mxu0 0.0
    %1845 = vmatprep.subr.mxu0 0.0
    %1846 = vmatpush1.msra.mxu0 0.0
    %1847 = vmatprep.subr.mxu0 0.0
    %1848 = vmatpush1.msra.mxu0 0.0
    %1849 = vmatprep.subr.mxu0 0.0
    %1850 = vmatpush1.msra.mxu0 0.0
    %1851 = vmatprep.subr.mxu0 0.0
    %1852 = vmatpush1.msra.mxu0 0.0
    %1853 = vmatprep.subr.mxu0 0.0
    %1854 = vmatpush1.msra.mxu0 0.0
    %1855 = vmatprep.subr.mxu0 0.0
    %1856 = vmatpush1.msra.mxu0 0.0
    %1857 = vmatprep.subr.mxu0 0.0
    %1858 = vmatpush1.msra.mxu0 0.0
    %1859 = vmatprep.subr.mxu0 0.0
    %1860 = vmatpush1.msra.mxu0 0.0
    %1861 = vmatprep.subr.mxu0 0.0
    %1862 = vmatpush1.msra.mxu0 0.0
    %1863 = vmatprep.subr.mxu0 0.0
    %1864 = vmatpush1.msra.mxu0 0.0
    %1865 = vmatprep.subr.mxu0 0.0
    %1866 = vmatpush1.msra.mxu0 0.0
    %1867 = vmatprep.subr.mxu0 0.0
    %1868 = vmatpush1.msra.mxu0 0.0
    %1869 = vmatprep.subr.mxu0 0.0
    %1870 = vmatpush1.msra.mxu0 0.0
    %1871 = vmatprep.subr.mxu0 0.0
    %1872 = vmatpush1.msra.mxu0 0.0
    %1873 = vmatprep.subr.mxu0 0.0
    %1874 = vmatpush1.msra.mxu0 0.0
    %1875 = vmatprep.subr.mxu0 0.0
    %1876 = vmatpush1.msra.mxu0 0.0
    %1877 = vmatprep.subr.mxu0 0.0
    %1878 = vmatpush1.msra.mxu0 0.0
    %1879 = vmatprep.subr.mxu0 0.0
    %1880 = vmatpush1.msra.mxu0 0.0
    %1881 = vmatprep.subr.mxu0 0.0
    %1882 = vmatpush1.msra.mxu0 0.0
    %1883 = vmatprep.subr.mxu0 0.0
    %1884 = vmatpush1.msra.mxu0 0.0
    %1885 = vmatprep.subr.mxu0 0.0
    %1886 = vmatpush1.msra.mxu0 0.0
    %1887 = vmatprep.subr.mxu0 0.0
    %1888 = vmatpush1.msra.mxu0 0.0
    %1889 = vmatprep.subr.mxu0 0.0
    %1890 = vmatpush1.msra.mxu0 0.0
    %1891 = vmatprep.subr.mxu0 0.0
    %1892 = vmatpush1.msra.mxu0 0.0
    %1893 = vmatprep.subr.mxu0 0.0
    %1894 = vmatpush1.msra.mxu0 0.0
    %1895 = vmatprep.subr.mxu0 0.0
    %1896 = vmatpush1.msra.mxu0 0.0
    %1897 = vmatprep.subr.mxu0 0.0
    %1898 = vmatpush1.msra.mxu0 0.0
    %1899 = vmatprep.mubr.f32.mxu0 0.0
    %1900 = vmatmul.mubr.f32.gmra.mrb[0].mxu0 %v1833
    %v1901 = vpop.f32.mrb[0].mxu0
    %v1902 = vadd.f32 0.0, %v1901
    %v1903 = vpop.f32.mrb[0].mxu0
    %1904 = vdwg.mxu0
    %v1905 = vadd.f32 %v1829, %v1902
    %v1906 = vxor.u32 %v1905, 2147483648
    %v1907 = vmul.f32 %v1906, 1.442695
    %v1908 = vpow.pop %v1907
    %v1909 = vadd.f32 %v1908, 1.0
    %v1910 = vrcp.pop %v1909
    %v1911 = vmul.f32 1.0, %v1910
    %v1912 = vtanh.pop %v1905
    %v1913 = vmul.f32 %v1911, %v1822
    %1915 = vrot.lane.b32.xlu0 %v1912, 64
    %v1916 = vpop.permute.xlu0 %1915
    %v1918 = vmul.f32 %v1911, %v1916
    %1920 = vrot.lane.b32.xlu0 %v1918, 32
    %v1921 = vpop.permute.xlu0 %1920
    %v1923 = vadd.f32 %v1913, %v1921
    %v1924 = vtanh.pop %v1923
    %1926 = vrot.lane.b32.xlu0 %v1924, 64
    %v1927 = vpop.permute.xlu0 %1926
    %v1929 = vmul.f32 %v1911, %v1927
    %v1930 = vld [vmem:[%s7] sm:$0xff]
    %v1931 = vld [vmem:[%s7 + $0x8] sm:$0xff]
    %v1932 = vld [vmem:[%s7 + $0x10] sm:$0xff]
    %v1933 = vld [vmem:[%s7 + $0x18] sm:$0xff]
    %v1934 = vld [vmem:[%s8] sm:$0x1]
    %v1936 = vlaneseq
    %v1937 = vshrl.u32 %v1936, 7
    %v1938 = vsub.s32 0, %v1937
    %v1939 = vrot.slane %v1934, %v1938
    %1942 = vrot.lane.b32.xlu0 %v1929, 32
    %v1943 = vpop.permute.xlu0 %1942
    %v1944 = vsel %vm167, %v1943, 0
    %1946 = vmatprep.subr.mxu0 0.0
    %1947 = vmatpush1.msra.mxu0 %v1930
    %1948 = vmatprep.subr.mxu0 0.0
    %1949 = vmatpush1.msra.mxu0 %v1931
    %1950 = vmatprep.subr.mxu0 0.0
    %1951 = vmatpush1.msra.mxu0 %v1932
    %1952 = vmatprep.subr.mxu0 0.0
    %1953 = vmatpush1.msra.mxu0 %v1933
    %1954 = vmatprep.subr.mxu0 0.0
    %1955 = vmatpush1.msra.mxu0 0.0
    %1956 = vmatprep.subr.mxu0 0.0
    %1957 = vmatpush1.msra.mxu0 0.0
    %1958 = vmatprep.subr.mxu0 0.0
    %1959 = vmatpush1.msra.mxu0 0.0
    %1960 = vmatprep.subr.mxu0 0.0
    %1961 = vmatpush1.msra.mxu0 0.0
    %1962 = vmatprep.subr.mxu0 0.0
    %1963 = vmatpush1.msra.mxu0 0.0
    %1964 = vmatprep.subr.mxu0 0.0
    %1965 = vmatpush1.msra.mxu0 0.0
    %1966 = vmatprep.subr.mxu0 0.0
    %1967 = vmatpush1.msra.mxu0 0.0
    %1968 = vmatprep.subr.mxu0 0.0
    %1969 = vmatpush1.msra.mxu0 0.0
    %1970 = vmatprep.subr.mxu0 0.0
    %1971 = vmatpush1.msra.mxu0 0.0
    %1972 = vmatprep.subr.mxu0 0.0
    %1973 = vmatpush1.msra.mxu0 0.0
    %1974 = vmatprep.subr.mxu0 0.0
    %1975 = vmatpush1.msra.mxu0 0.0
    %1976 = vmatprep.subr.mxu0 0.0
    %1977 = vmatpush1.msra.mxu0 0.0
    %1978 = vmatprep.subr.mxu0 0.0
    %1979 = vmatpush1.msra.mxu0 0.0
    %1980 = vmatprep.subr.mxu0 0.0
    %1981 = vmatpush1.msra.mxu0 0.0
    %1982 = vmatprep.subr.mxu0 0.0
    %1983 = vmatpush1.msra.mxu0 0.0
    %1984 = vmatprep.subr.mxu0 0.0
    %1985 = vmatpush1.msra.mxu0 0.0
    %1986 = vmatprep.subr.mxu0 0.0
    %1987 = vmatpush1.msra.mxu0 0.0
    %1988 = vmatprep.subr.mxu0 0.0
    %1989 = vmatpush1.msra.mxu0 0.0
    %1990 = vmatprep.subr.mxu0 0.0
    %1991 = vmatpush1.msra.mxu0 0.0
    %1992 = vmatprep.subr.mxu0 0.0
    %1993 = vmatpush1.msra.mxu0 0.0
    %1994 = vmatprep.subr.mxu0 0.0
    %1995 = vmatpush1.msra.mxu0 0.0
    %1996 = vmatprep.subr.mxu0 0.0
    %1997 = vmatpush1.msra.mxu0 0.0
    %1998 = vmatprep.subr.mxu0 0.0
    %1999 = vmatpush1.msra.mxu0 0.0
    %2000 = vmatprep.subr.mxu0 0.0
    %2001 = vmatpush1.msra.mxu0 0.0
    %2002 = vmatprep.subr.mxu0 0.0
    %2003 = vmatpush1.msra.mxu0 0.0
    %2004 = vmatprep.subr.mxu0 0.0
    %2005 = vmatpush1.msra.mxu0 0.0
    %2006 = vmatprep.subr.mxu0 0.0
    %2007 = vmatpush1.msra.mxu0 0.0
    %2008 = vmatprep.subr.mxu0 0.0
    %2009 = vmatpush1.msra.mxu0 0.0
    %2010 = vmatprep.mubr.f32.mxu0 0.0
    %2011 = vmatmul.mubr.f32.gmra.mrb[0].mxu0 %v1944
    %v2012 = vpop.f32.mrb[0].mxu0
    %v2013 = vadd.f32 %v1939, %v2012
    %v2014 = vpop.f32.mrb[0].mxu0
    %2015 = vdwg.mxu0
    %v2016 = vtanh.pop %v2013
    %vm2017 = vcmask 60416
    %2018 = vst.msk [vmem:[#allocation7] sm:$0xf] %vm2017, %v2016
    // Predicated region
    $region42: #{tpu_custom_call.1} parent=1 // pred_check
      _
    $region43: #{tpu_custom_call.1} parent=1 // pred_check_branch
      %2020 = sbr.rel (0) target = $region45
    $region44: #{tpu_custom_call.1} parent=1 // pred_region
      %s2022 = ssub.s32 64, 64
      %2023 = vsyncadd [#allocation6], %s2022
      %s2025 = sshll.u32 [#allocation7], 4
      %s2026 = int_to_ptr.vmem [resolvable:$true] %s2025
      %2028 = dma.vmem_to_hbm [thread:$0]  %s2026, 64, %s9, [#allocation6]
    $region45: #{tpu_custom_call.1} parent=1 // pred_fallthru
      _
    // Predicated region
    $region46: #{tpu_custom_call.1} parent=1 // pred_check
      _
    $region47: #{tpu_custom_call.1} parent=1 // pred_check_branch
      %2030 = sbr.rel (0) target = $region49
    $region48: #{tpu_custom_call.1} parent=1 // pred_region
      %2031 = dma.done [#allocation6], 64
    $region49: #{tpu_custom_call.1} parent=1 // pred_fallthru
      _
    %2032 = vsyncpa [#allocation5], 1
    %2033 = vsyncpa [#allocation6], 1

</llo_original>
